<compile_context>
chip_gen: v7x
topology: tpu7x:2x2x1
jax: 0.10.0
libtpu: 0.0.40
codegen_flags: <defaults>
</compile_context>

<pallas_src>
import functools

import jax
import jax.numpy as jnp
import numpy as np
from jax.experimental import pallas as pl
from jax.experimental.pallas import tpu as pltpu


def _gelu_exact(x):
    # matches torch.nn.functional.gelu (default, erf-based)
    return 0.5 * x * (1.0 + jax.lax.erf(x * 0.7071067811865476))


def _ru8(n):
    return ((n + 7) // 8) * 8


# tap offsets (di, dj); t = ki*K + kj matches the PyTorch weight layout
OFFS3 = [(di, dj) for di in (-1, 0, 1) for dj in (-1, 0, 1)]
OFFS5 = [(di, dj) for di in (-2, -1, 0, 1, 2) for dj in (-2, -1, 0, 1, 2)]
OFFSD = [(di, dj) for di in (-6, -3, 0, 3, 6) for dj in (-6, -3, 0, 3, 6)]


def baseblock7_kernel(
    x_ref,        # (P*C, HW)
    wm3_ref,      # (10, P*2Hd, HW)  9 taps (weight*mask) + bias slab
    wm5_ref,      # (26, P*C,  HW)   25 taps + bias
    wmd_ref,      # (26, P*C,  HW)   25 taps + bias
    sw_ref,       # (R, HW)          packed 1x1 weights + pre-broadcast biases
    o_ref,        # (P*C, HW)
    *, H, W, C, Hd, P, res_scale, r_w_in, r_w_cat, r_b_in, r_b_cat,
):
    HW = H * W
    x = x_ref[...]                                      # (P*C, HW), f32

    def dwconv(v, wm_ref, offsets):
        """Depthwise conv on (Ch, HW): one lane rotation (XLU) + one FMA against
        the pre-fused weight*mask slab per tap; bias = last slab entry."""
        acc = wm_ref[len(offsets)]                       # pre-broadcast bias
        for t, (di, dj) in enumerate(offsets):
            s = di * W + dj
            shifted = v if s == 0 else pltpu.roll(v, shift=(-s) % HW, axis=1)
            acc = acc + shifted * wm_ref[t]
        return acc

    def matvec_fma(wmat, v, bias_b, K):
        """(Cout, K) @ (K, HW) + bias as VPU broadcast-FMA (K is tiny)."""
        acc = bias_b + wmat[:, 0:1] * v[0:1, :]
        for k in range(1, K):
            acc = acc + wmat[:, k:k + 1] * v[k:k + 1, :]
        return acc

    def cat(parts):
        return parts[0] if len(parts) == 1 else jnp.concatenate(parts, axis=0)

    # static views into the packed small-weights slab (zero-cost ref slices)
    w_in = sw_ref[r_w_in:r_w_in + 2 * Hd, 0:C]           # (2Hd, C)
    w_cat = sw_ref[r_w_cat:r_w_cat + 2 * C, 0:Hd]        # (2C, Hd)
    b_in_b = sw_ref[r_b_in:r_b_in + 2 * Hd, :]           # (2Hd, HW) pre-broadcast
    b_cat_b = sw_ref[r_b_cat:r_b_cat + 2 * C, :]         # (2C, HW)  pre-broadcast

    # ---------------- project_in: 1x1 conv (K = C), per packed image ---------
    h = cat([matvec_fma(w_in, x[p * C:(p + 1) * C, :], b_in_b, C)
             for p in range(P)])                         # (P*2Hd, HW)

    # ---------------- dwconv: 3x3 depthwise, padding=1 -----------------------
    h = dwconv(h, wm3_ref, OFFS3)

    # ---------------- chunk(2, channels); gelu(x1) * x2 ----------------------
    g = [_gelu_exact(h[p * 2 * Hd:p * 2 * Hd + Hd, :])
         * h[p * 2 * Hd + Hd:(p + 1) * 2 * Hd, :] for p in range(P)]

    # ------- fused project_out + attention.pointwise → [y ; a] ---------------
    y_parts, a_parts = [], []
    for p in range(P):
        ya = matvec_fma(w_cat, g[p], b_cat_b, Hd)        # (2C, HW)
        y_parts.append(ya[:C, :])                        # u = x.clone() in Attention
        a_parts.append(ya[C:, :])
    y = cat(y_parts)                                     # (P*C, HW)
    a = cat(a_parts)

    # ---------------- attention.depthwise: 5x5, padding=2 --------------------
    a = dwconv(a, wm5_ref, OFFS5)
    # -------- attention.depthwise_dilated: 5x5, dilation=3, padding=6 --------
    a = dwconv(a, wmd_ref, OFFSD)

    out = y * a                                          # Attention: u * attn
    if res_scale != 1.0:
        out = out * res_scale
    o_ref[...] = out + x


def _dw_slab(w_taps, bias, offsets, H, W, pack):
    """Build (taps+1, pack*Ch, H*W) slab: per-tap weight x border-mask; last = bias."""
    HW = H * W
    pos = np.arange(HW)
    row, col = pos // W, pos % W
    parts = []
    for t, (di, dj) in enumerate(offsets):
        ok = ((row + di >= 0) & (row + di < H) & (col + dj >= 0) & (col + dj < W))
        mask = jnp.asarray(ok.astype(np.float32))                   # (HW,)
        parts.append(w_taps[:, t][:, None] * mask[None, :])         # (Ch, HW)
    parts.append(jnp.broadcast_to(bias[:, None], parts[0].shape))   # conv bias
    slab = jnp.stack(parts, axis=0)                                 # (taps+1, Ch, HW)
    return jnp.tile(slab, (1, pack, 1)) if pack > 1 else slab


def _pack_small(w_in, b_in, w_cat, b_cat, HW):
    """One (R, HW) slab: w_in, w_cat (lane-left-justified) + pre-broadcast biases."""
    twoHd, C = w_in.shape
    twoC, Hd = w_cat.shape
    r_w_in = 0
    r_w_cat = r_w_in + _ru8(twoHd)
    r_b_in = r_w_cat + _ru8(twoC)
    r_b_cat = r_b_in + _ru8(twoHd)
    R = r_b_cat + _ru8(twoC)
    slab = jnp.zeros((R, HW), jnp.float32)
    slab = slab.at[r_w_in:r_w_in + twoHd, 0:C].set(w_in)
    slab = slab.at[r_w_cat:r_w_cat + twoC, 0:Hd].set(w_cat)
    slab = slab.at[r_b_in:r_b_in + twoHd, :].set(jnp.broadcast_to(b_in[:, None], (twoHd, HW)))
    slab = slab.at[r_b_cat:r_b_cat + twoC, :].set(jnp.broadcast_to(b_cat[:, None], (twoC, HW)))
    return slab, dict(r_w_in=r_w_in, r_w_cat=r_w_cat, r_b_in=r_b_in, r_b_cat=r_b_cat)


def _num_tensorcores_per_device():
    try:
        d = jax.devices()[0]
        kind = str(getattr(d, "device_kind", "")).lower()
        if ("lite" in kind) or ("v5e" in kind) or ("v6e" in kind):
            return 1                     # single-TC inference chips
        nc = getattr(d, "num_cores", None)
        if isinstance(nc, int) and nc > 0:
            return nc
    except Exception:
        pass
    return 2                             # v4 / v5p / v7x megacore default


def _choose_batch_pack(N):
    if N < 2 or N % 2 != 0:
        return 1
    cores = _num_tensorcores_per_device()
    # Pack 2 images/step if the chip is single-TC, or if the grid stays >= cores.
    if cores == 1 or (N // 2) >= cores:
        return 2
    return 1


def baseblock7_forward(x_nchw, params, *, res_scale=1.0, batch_pack=None):
    N, C, H, W = x_nchw.shape
    Hd = params["w_dw"].shape[-1] // 2
    HW = H * W
    HI = jax.lax.Precision.HIGHEST
    f32 = jnp.float32

    P = _choose_batch_pack(N) if batch_pack is None else int(batch_pack)
    if N % P != 0:
        P = 1
    NB = N // P

    # NCHW -> (NB, P*C, H*W): free reshape, spatial lands on the lane dimension;
    # P consecutive images are stacked along the sublane (channel) axis.
    x = x_nchw.astype(f32).reshape(NB, P * C, HW)

    # ---- repack weights: (Cout on sublanes, contraction/taps on lanes) ------
    w_in = params["w_in"].astype(f32).T                       # (2Hd, C)
    b_in = params["b_in"].astype(f32).reshape(-1)             # (2Hd,)
    w_dw = params["w_dw"].astype(f32).reshape(9, 2 * Hd).T    # (2Hd, 9), t = ki*3+kj
    b_dw = params["b_dw"].astype(f32).reshape(-1)

    w_out_t = params["w_out"].astype(f32).T                   # (C, Hd)
    b_out_c = params["b_out"].astype(f32).reshape(-1, 1)      # (C, 1)
    w_pw_t = params["w_pw"].astype(f32).T                     # (C, C)
    b_pw_c = params["b_pw"].astype(f32).reshape(-1, 1)        # (C, 1)
    # Fuse project_out + attention.pointwise:
    #   y = Wo g + bo ;  a = Wp y + bp = (Wp Wo) g + (Wp bo + bp)
    w_cat = jnp.concatenate(
        [w_out_t, jnp.dot(w_pw_t, w_out_t, precision=HI)], axis=0)           # (2C, Hd)
    b_cat = jnp.concatenate(
        [b_out_c, jnp.dot(w_pw_t, b_out_c, precision=HI) + b_pw_c],
        axis=0).reshape(-1)                                                   # (2C,)

    w_d5 = params["w_d5"].astype(f32).reshape(25, C).T        # (C, 25), t = ki*5+kj
    b_d5 = params["b_d5"].astype(f32).reshape(-1)
    w_dd5 = params["w_dd5"].astype(f32).reshape(25, C).T
    b_dd5 = params["b_dd5"].astype(f32).reshape(-1)

    # ---- pre-fused (weight x border-mask) slabs + packed small-weight slab --
    wm3 = _dw_slab(w_dw, b_dw, OFFS3, H, W, P)                # (10, P*2Hd, HW)
    wm5 = _dw_slab(w_d5, b_d5, OFFS5, H, W, P)                # (26, P*C,  HW)
    wmd = _dw_slab(w_dd5, b_dd5, OFFSD, H, W, P)              # (26, P*C,  HW)
    sw, offs = _pack_small(w_in, b_in, w_cat, b_cat, HW)      # (R, HW)

    kernel = functools.partial(
        baseblock7_kernel, H=H, W=W, C=C, Hd=Hd, P=P,
        res_scale=float(res_scale), **offs)

    grid_spec = pltpu.PrefetchScalarGridSpec(
        num_scalar_prefetch=0,
        grid=(NB,),
        in_specs=[
            pl.BlockSpec((None, P * C, HW), lambda n: (n, 0, 0)),   # x
            pl.BlockSpec(wm3.shape, lambda n: (0, 0, 0)),           # resident weights
            pl.BlockSpec(wm5.shape, lambda n: (0, 0, 0)),
            pl.BlockSpec(wmd.shape, lambda n: (0, 0, 0)),
            pl.BlockSpec(sw.shape, lambda n: (0, 0)),
        ],
        out_specs=pl.BlockSpec((None, P * C, HW), lambda n: (n, 0, 0)),
        # No scratch: depthwise convs are done in registers (rolls + slab FMAs).
    )

    out = pl.pallas_call(
        kernel,
        grid_spec=grid_spec,
        out_shape=jax.ShapeDtypeStruct((NB, P * C, HW), jnp.float32),
        compiler_params=pltpu.CompilerParams(
            dimension_semantics=("parallel",)),   # batch steps independent
    )(x, wm3, wm5, wmd, sw)

    return out.reshape(N, C, H, W)


def reference_forward(x_nchw, params, *, res_scale=1.0):
    """Pure-JAX NCHW reference (mirrors the PyTorch Baseblock7)."""
    HI = jax.lax.Precision.HIGHEST

    def conv1x1(x, w, b):                              # w: (Cin, Cout), b: (1, Cout)
        y = jnp.einsum("nchw,cd->ndhw", x, w, precision=HI)
        return y + b.reshape(1, -1, 1, 1)

    def dwconv(x, w, b, pad, dilation=1):              # w: (kh, kw, C), b: (1, C)
        ch = x.shape[1]
        wt = jnp.transpose(w, (2, 0, 1))[:, None, :, :]      # (C, 1, kh, kw)
        y = jax.lax.conv_general_dilated(
            x, wt, window_strides=(1, 1), padding=[(pad, pad), (pad, pad)],
            rhs_dilation=(dilation, dilation),
            dimension_numbers=("NCHW", "OIHW", "NCHW"),
            feature_group_count=ch, precision=HI)
        return y + b.reshape(1, -1, 1, 1)

    identity = x_nchw
    h = conv1x1(x_nchw, params["w_in"], params["b_in"])
    h = dwconv(h, params["w_dw"], params["b_dw"], pad=1)
    x1, x2 = jnp.split(h, 2, axis=1)
    g = _gelu_exact(x1) * x2
    y = conv1x1(g, params["w_out"], params["b_out"])
    u = y
    a = conv1x1(y, params["w_pw"], params["b_pw"])
    a = dwconv(a, params["w_d5"], params["b_d5"], pad=2)
    a = dwconv(a, params["w_dd5"], params["b_dd5"], pad=6, dilation=3)
    return u * a * res_scale + identity


if __name__ == "__main__":
    # Baseblock7(dim=4, ffn_expansion_factor=2.0, bias=True), input (2, 4, 16, 16)
    N, dim, H, W = 2, 4, 16, 16
    ffn_expansion_factor = 2.0
    Hd = int(dim * ffn_expansion_factor)               # hidden_features = 8
    res_scale = 1.0

    key = jax.random.PRNGKey(0)
    ks = jax.random.split(key, 13)
    params = {
        "w_in":  0.2 * jax.random.normal(ks[0],  (dim, 2 * Hd), jnp.float32),
        "b_in":  0.1 * jax.random.normal(ks[1],  (1, 2 * Hd),   jnp.float32),
        "w_dw":  0.2 * jax.random.normal(ks[2],  (3, 3, 2 * Hd), jnp.float32),
        "b_dw":  0.1 * jax.random.normal(ks[3],  (1, 2 * Hd),   jnp.float32),
        "w_out": 0.2 * jax.random.normal(ks[4],  (Hd, dim),     jnp.float32),
        "b_out": 0.1 * jax.random.normal(ks[5],  (1, dim),      jnp.float32),
        "w_pw":  0.2 * jax.random.normal(ks[6],  (dim, dim),    jnp.float32),
        "b_pw":  0.1 * jax.random.normal(ks[7],  (1, dim),      jnp.float32),
        "w_d5":  0.1 * jax.random.normal(ks[8],  (5, 5, dim),   jnp.float32),
        "b_d5":  0.1 * jax.random.normal(ks[9],  (1, dim),      jnp.float32),
        "w_dd5": 0.1 * jax.random.normal(ks[10], (5, 5, dim),   jnp.float32),
        "b_dd5": 0.1 * jax.random.normal(ks[11], (1, dim),      jnp.float32),
    }
    x = jax.random.normal(ks[12], (N, dim, H, W), jnp.float32)

    ref = reference_forward(x, params, res_scale=res_scale)

    # Validate the auto-selected layout plus both batch-packing variants
    # (unpacked grid=(N,) for multi-TC chips, sublane-packed grid=(N/2,) for
    # single-TC v5e/v6e) so every code path is checked on whatever chip runs this.
    for bp in (None, 1, 2):
        out = baseblock7_forward(x, params, res_scale=res_scale, batch_pack=bp)
        out = jax.block_until_ready(out)
        np.testing.assert_allclose(np.asarray(out), np.asarray(ref),
                                   rtol=1e-4, atol=1e-4)

    print("KERNEL_OK")
</pallas_src>

<mosaic_0001>
module attributes {stable_mosaic.version = 11 : i64} {
  func.func @baseblock7_kernel(%arg0: i32, %arg1: memref<1x4x256xf32, #tpu.memory_space<vmem>>, %arg2: memref<10x16x256xf32, #tpu.memory_space<vmem>>, %arg3: memref<26x4x256xf32, #tpu.memory_space<vmem>>, %arg4: memref<26x4x256xf32, #tpu.memory_space<vmem>>, %arg5: memref<48x256xf32, #tpu.memory_space<vmem>>, %arg6: memref<1x4x256xf32, #tpu.memory_space<vmem>>) attributes {dimension_semantics = [#tpu.dimension_semantics<parallel>], iteration_bounds = array<i64: 2>, scalar_prefetch = 0 : i64, scratch_operands = 0 : i64, tpu.core_type = #tpu.core_type<tc>, window_params = [{transform_indices = @transform_0, window_bounds = array<i64: 1, 4, 256>}, {pipeline_mode = #tpu.pipeline_mode<synchronous>, transform_indices = @transform_1, window_bounds = array<i64: 10, 16, 256>}, {pipeline_mode = #tpu.pipeline_mode<synchronous>, transform_indices = @transform_2, window_bounds = array<i64: 26, 4, 256>}, {pipeline_mode = #tpu.pipeline_mode<synchronous>, transform_indices = @transform_3, window_bounds = array<i64: 26, 4, 256>}, {pipeline_mode = #tpu.pipeline_mode<synchronous>, transform_indices = @transform_4, window_bounds = array<i64: 48, 256>}, {transform_indices = @transform_5, window_bounds = array<i64: 1, 4, 256>}]} {
    %c0 = arith.constant 0 : index
    %c0_0 = arith.constant 0 : index
    %c0_1 = arith.constant 0 : index
    %0 = vector.load %arg1[%c0, %c0_0, %c0_1] : memref<1x4x256xf32, #tpu.memory_space<vmem>>, vector<1x4x256xf32>
    %1 = vector.shape_cast %0 : vector<1x4x256xf32> to vector<4x256xf32>
    %c0_2 = arith.constant 0 : index
    %c0_3 = arith.constant 0 : index
    %2 = vector.load %arg5[%c0_2, %c0_3] : memref<48x256xf32, #tpu.memory_space<vmem>>, vector<16x4xf32>
    %c16 = arith.constant 16 : index
    %c0_4 = arith.constant 0 : index
    %3 = vector.load %arg5[%c16, %c0_4] : memref<48x256xf32, #tpu.memory_space<vmem>>, vector<8x8xf32>
    %c24 = arith.constant 24 : index
    %c0_5 = arith.constant 0 : index
    %4 = vector.load %arg5[%c24, %c0_5] : memref<48x256xf32, #tpu.memory_space<vmem>>, vector<16x256xf32>
    %c40 = arith.constant 40 : index
    %c0_6 = arith.constant 0 : index
    %5 = vector.load %arg5[%c40, %c0_6] : memref<48x256xf32, #tpu.memory_space<vmem>>, vector<8x256xf32>
    %6 = vector.extract_strided_slice %2 {offsets = [0, 0], sizes = [16, 1], strides = [1, 1]} : vector<16x4xf32> to vector<16x1xf32>
    %7 = vector.extract_strided_slice %1 {offsets = [0, 0], sizes = [1, 256], strides = [1, 1]} : vector<4x256xf32> to vector<1x256xf32>
    %8 = vector.broadcast %6 : vector<16x1xf32> to vector<16x256xf32>
    %9 = vector.broadcast %7 : vector<1x256xf32> to vector<16x256xf32>
    %10 = arith.mulf %8, %9 : vector<16x256xf32>
    %11 = arith.addf %4, %10 : vector<16x256xf32>
    %12 = vector.extract_strided_slice %2 {offsets = [0, 1], sizes = [16, 1], strides = [1, 1]} : vector<16x4xf32> to vector<16x1xf32>
    %13 = vector.extract_strided_slice %1 {offsets = [1, 0], sizes = [1, 256], strides = [1, 1]} : vector<4x256xf32> to vector<1x256xf32>
    %14 = vector.broadcast %12 : vector<16x1xf32> to vector<16x256xf32>
    %15 = vector.broadcast %13 : vector<1x256xf32> to vector<16x256xf32>
    %16 = arith.mulf %14, %15 : vector<16x256xf32>
    %17 = arith.addf %11, %16 : vector<16x256xf32>
    %18 = vector.extract_strided_slice %2 {offsets = [0, 2], sizes = [16, 1], strides = [1, 1]} : vector<16x4xf32> to vector<16x1xf32>
    %19 = vector.extract_strided_slice %1 {offsets = [2, 0], sizes = [1, 256], strides = [1, 1]} : vector<4x256xf32> to vector<1x256xf32>
    %20 = vector.broadcast %18 : vector<16x1xf32> to vector<16x256xf32>
    %21 = vector.broadcast %19 : vector<1x256xf32> to vector<16x256xf32>
    %22 = arith.mulf %20, %21 : vector<16x256xf32>
    %23 = arith.addf %17, %22 : vector<16x256xf32>
    %24 = vector.extract_strided_slice %2 {offsets = [0, 3], sizes = [16, 1], strides = [1, 1]} : vector<16x4xf32> to vector<16x1xf32>
    %25 = vector.extract_strided_slice %1 {offsets = [3, 0], sizes = [1, 256], strides = [1, 1]} : vector<4x256xf32> to vector<1x256xf32>
    %26 = vector.broadcast %24 : vector<16x1xf32> to vector<16x256xf32>
    %27 = vector.broadcast %25 : vector<1x256xf32> to vector<16x256xf32>
    %28 = arith.mulf %26, %27 : vector<16x256xf32>
    %29 = arith.addf %23, %28 : vector<16x256xf32>
    %c9 = arith.constant 9 : index
    %c0_7 = arith.constant 0 : index
    %c0_8 = arith.constant 0 : index
    %30 = vector.load %arg2[%c9, %c0_7, %c0_8] : memref<10x16x256xf32, #tpu.memory_space<vmem>>, vector<1x16x256xf32>
    %31 = vector.shape_cast %30 : vector<1x16x256xf32> to vector<16x256xf32>
    %c17_i32 = arith.constant 17 : i32
    %32 = tpu.dynamic_rotate %29 by %c17_i32 dim 1 : vector<16x256xf32>, i32 -> vector<16x256xf32>
    %c0_9 = arith.constant 0 : index
    %c0_10 = arith.constant 0 : index
    %c0_11 = arith.constant 0 : index
    %33 = vector.load %arg2[%c0_9, %c0_10, %c0_11] : memref<10x16x256xf32, #tpu.memory_space<vmem>>, vector<1x16x256xf32>
    %34 = vector.shape_cast %33 : vector<1x16x256xf32> to vector<16x256xf32>
    %35 = arith.mulf %32, %34 : vector<16x256xf32>
    %36 = arith.addf %31, %35 : vector<16x256xf32>
    %c16_i32 = arith.constant 16 : i32
    %37 = tpu.dynamic_rotate %29 by %c16_i32 dim 1 : vector<16x256xf32>, i32 -> vector<16x256xf32>
    %c1 = arith.constant 1 : index
    %c0_12 = arith.constant 0 : index
    %c0_13 = arith.constant 0 : index
    %38 = vector.load %arg2[%c1, %c0_12, %c0_13] : memref<10x16x256xf32, #tpu.memory_space<vmem>>, vector<1x16x256xf32>
    %39 = vector.shape_cast %38 : vector<1x16x256xf32> to vector<16x256xf32>
    %40 = arith.mulf %37, %39 : vector<16x256xf32>
    %41 = arith.addf %36, %40 : vector<16x256xf32>
    %c15_i32 = arith.constant 15 : i32
    %42 = tpu.dynamic_rotate %29 by %c15_i32 dim 1 : vector<16x256xf32>, i32 -> vector<16x256xf32>
    %c2 = arith.constant 2 : index
    %c0_14 = arith.constant 0 : index
    %c0_15 = arith.constant 0 : index
    %43 = vector.load %arg2[%c2, %c0_14, %c0_15] : memref<10x16x256xf32, #tpu.memory_space<vmem>>, vector<1x16x256xf32>
    %44 = vector.shape_cast %43 : vector<1x16x256xf32> to vector<16x256xf32>
    %45 = arith.mulf %42, %44 : vector<16x256xf32>
    %46 = arith.addf %41, %45 : vector<16x256xf32>
    %c1_i32 = arith.constant 1 : i32
    %47 = tpu.dynamic_rotate %29 by %c1_i32 dim 1 : vector<16x256xf32>, i32 -> vector<16x256xf32>
    %c3 = arith.constant 3 : index
    %c0_16 = arith.constant 0 : index
    %c0_17 = arith.constant 0 : index
    %48 = vector.load %arg2[%c3, %c0_16, %c0_17] : memref<10x16x256xf32, #tpu.memory_space<vmem>>, vector<1x16x256xf32>
    %49 = vector.shape_cast %48 : vector<1x16x256xf32> to vector<16x256xf32>
    %50 = arith.mulf %47, %49 : vector<16x256xf32>
    %51 = arith.addf %46, %50 : vector<16x256xf32>
    %c4 = arith.constant 4 : index
    %c0_18 = arith.constant 0 : index
    %c0_19 = arith.constant 0 : index
    %52 = vector.load %arg2[%c4, %c0_18, %c0_19] : memref<10x16x256xf32, #tpu.memory_space<vmem>>, vector<1x16x256xf32>
    %53 = vector.shape_cast %52 : vector<1x16x256xf32> to vector<16x256xf32>
    %54 = arith.mulf %29, %53 : vector<16x256xf32>
    %55 = arith.addf %51, %54 : vector<16x256xf32>
    %c255_i32 = arith.constant 255 : i32
    %56 = tpu.dynamic_rotate %29 by %c255_i32 dim 1 : vector<16x256xf32>, i32 -> vector<16x256xf32>
    %c5 = arith.constant 5 : index
    %c0_20 = arith.constant 0 : index
    %c0_21 = arith.constant 0 : index
    %57 = vector.load %arg2[%c5, %c0_20, %c0_21] : memref<10x16x256xf32, #tpu.memory_space<vmem>>, vector<1x16x256xf32>
    %58 = vector.shape_cast %57 : vector<1x16x256xf32> to vector<16x256xf32>
    %59 = arith.mulf %56, %58 : vector<16x256xf32>
    %60 = arith.addf %55, %59 : vector<16x256xf32>
    %c241_i32 = arith.constant 241 : i32
    %61 = tpu.dynamic_rotate %29 by %c241_i32 dim 1 : vector<16x256xf32>, i32 -> vector<16x256xf32>
    %c6 = arith.constant 6 : index
    %c0_22 = arith.constant 0 : index
    %c0_23 = arith.constant 0 : index
    %62 = vector.load %arg2[%c6, %c0_22, %c0_23] : memref<10x16x256xf32, #tpu.memory_space<vmem>>, vector<1x16x256xf32>
    %63 = vector.shape_cast %62 : vector<1x16x256xf32> to vector<16x256xf32>
    %64 = arith.mulf %61, %63 : vector<16x256xf32>
    %65 = arith.addf %60, %64 : vector<16x256xf32>
    %c240_i32 = arith.constant 240 : i32
    %66 = tpu.dynamic_rotate %29 by %c240_i32 dim 1 : vector<16x256xf32>, i32 -> vector<16x256xf32>
    %c7 = arith.constant 7 : index
    %c0_24 = arith.constant 0 : index
    %c0_25 = arith.constant 0 : index
    %67 = vector.load %arg2[%c7, %c0_24, %c0_25] : memref<10x16x256xf32, #tpu.memory_space<vmem>>, vector<1x16x256xf32>
    %68 = vector.shape_cast %67 : vector<1x16x256xf32> to vector<16x256xf32>
    %69 = arith.mulf %66, %68 : vector<16x256xf32>
    %70 = arith.addf %65, %69 : vector<16x256xf32>
    %c239_i32 = arith.constant 239 : i32
    %71 = tpu.dynamic_rotate %29 by %c239_i32 dim 1 : vector<16x256xf32>, i32 -> vector<16x256xf32>
    %c8 = arith.constant 8 : index
    %c0_26 = arith.constant 0 : index
    %c0_27 = arith.constant 0 : index
    %72 = vector.load %arg2[%c8, %c0_26, %c0_27] : memref<10x16x256xf32, #tpu.memory_space<vmem>>, vector<1x16x256xf32>
    %73 = vector.shape_cast %72 : vector<1x16x256xf32> to vector<16x256xf32>
    %74 = arith.mulf %71, %73 : vector<16x256xf32>
    %75 = arith.addf %70, %74 : vector<16x256xf32>
    %76 = vector.extract_strided_slice %75 {offsets = [0, 0], sizes = [8, 256], strides = [1, 1]} : vector<16x256xf32> to vector<8x256xf32>
    %cst = arith.constant 5.000000e-01 : f32
    %77 = vector.broadcast %cst : f32 to vector<8x256xf32>
    %78 = arith.mulf %77, %76 : vector<8x256xf32>
    %cst_28 = arith.constant 0.707106769 : f32
    %79 = vector.broadcast %cst_28 : f32 to vector<8x256xf32>
    %80 = arith.mulf %76, %79 : vector<8x256xf32>
    %81 = math.erf %80 : vector<8x256xf32>
    %cst_29 = arith.constant 1.000000e+00 : f32
    %82 = vector.broadcast %cst_29 : f32 to vector<8x256xf32>
    %83 = arith.addf %82, %81 : vector<8x256xf32>
    %84 = arith.mulf %78, %83 : vector<8x256xf32>
    %85 = vector.extract_strided_slice %75 {offsets = [8, 0], sizes = [8, 256], strides = [1, 1]} : vector<16x256xf32> to vector<8x256xf32>
    %86 = arith.mulf %84, %85 : vector<8x256xf32>
    %87 = vector.extract_strided_slice %3 {offsets = [0, 0], sizes = [8, 1], strides = [1, 1]} : vector<8x8xf32> to vector<8x1xf32>
    %88 = vector.extract_strided_slice %86 {offsets = [0, 0], sizes = [1, 256], strides = [1, 1]} : vector<8x256xf32> to vector<1x256xf32>
    %89 = vector.broadcast %87 : vector<8x1xf32> to vector<8x256xf32>
    %90 = vector.broadcast %88 : vector<1x256xf32> to vector<8x256xf32>
    %91 = arith.mulf %89, %90 : vector<8x256xf32>
    %92 = arith.addf %5, %91 : vector<8x256xf32>
    %93 = vector.extract_strided_slice %3 {offsets = [0, 1], sizes = [8, 1], strides = [1, 1]} : vector<8x8xf32> to vector<8x1xf32>
    %94 = vector.extract_strided_slice %86 {offsets = [1, 0], sizes = [1, 256], strides = [1, 1]} : vector<8x256xf32> to vector<1x256xf32>
    %95 = vector.broadcast %93 : vector<8x1xf32> to vector<8x256xf32>
    %96 = vector.broadcast %94 : vector<1x256xf32> to vector<8x256xf32>
    %97 = arith.mulf %95, %96 : vector<8x256xf32>
    %98 = arith.addf %92, %97 : vector<8x256xf32>
    %99 = vector.extract_strided_slice %3 {offsets = [0, 2], sizes = [8, 1], strides = [1, 1]} : vector<8x8xf32> to vector<8x1xf32>
    %100 = vector.extract_strided_slice %86 {offsets = [2, 0], sizes = [1, 256], strides = [1, 1]} : vector<8x256xf32> to vector<1x256xf32>
    %101 = vector.broadcast %99 : vector<8x1xf32> to vector<8x256xf32>
    %102 = vector.broadcast %100 : vector<1x256xf32> to vector<8x256xf32>
    %103 = arith.mulf %101, %102 : vector<8x256xf32>
    %104 = arith.addf %98, %103 : vector<8x256xf32>
    %105 = vector.extract_strided_slice %3 {offsets = [0, 3], sizes = [8, 1], strides = [1, 1]} : vector<8x8xf32> to vector<8x1xf32>
    %106 = vector.extract_strided_slice %86 {offsets = [3, 0], sizes = [1, 256], strides = [1, 1]} : vector<8x256xf32> to vector<1x256xf32>
    %107 = vector.broadcast %105 : vector<8x1xf32> to vector<8x256xf32>
    %108 = vector.broadcast %106 : vector<1x256xf32> to vector<8x256xf32>
    %109 = arith.mulf %107, %108 : vector<8x256xf32>
    %110 = arith.addf %104, %109 : vector<8x256xf32>
    %111 = vector.extract_strided_slice %3 {offsets = [0, 4], sizes = [8, 1], strides = [1, 1]} : vector<8x8xf32> to vector<8x1xf32>
    %112 = vector.extract_strided_slice %86 {offsets = [4, 0], sizes = [1, 256], strides = [1, 1]} : vector<8x256xf32> to vector<1x256xf32>
    %113 = vector.broadcast %111 : vector<8x1xf32> to vector<8x256xf32>
    %114 = vector.broadcast %112 : vector<1x256xf32> to vector<8x256xf32>
    %115 = arith.mulf %113, %114 : vector<8x256xf32>
    %116 = arith.addf %110, %115 : vector<8x256xf32>
    %117 = vector.extract_strided_slice %3 {offsets = [0, 5], sizes = [8, 1], strides = [1, 1]} : vector<8x8xf32> to vector<8x1xf32>
    %118 = vector.extract_strided_slice %86 {offsets = [5, 0], sizes = [1, 256], strides = [1, 1]} : vector<8x256xf32> to vector<1x256xf32>
    %119 = vector.broadcast %117 : vector<8x1xf32> to vector<8x256xf32>
    %120 = vector.broadcast %118 : vector<1x256xf32> to vector<8x256xf32>
    %121 = arith.mulf %119, %120 : vector<8x256xf32>
    %122 = arith.addf %116, %121 : vector<8x256xf32>
    %123 = vector.extract_strided_slice %3 {offsets = [0, 6], sizes = [8, 1], strides = [1, 1]} : vector<8x8xf32> to vector<8x1xf32>
    %124 = vector.extract_strided_slice %86 {offsets = [6, 0], sizes = [1, 256], strides = [1, 1]} : vector<8x256xf32> to vector<1x256xf32>
    %125 = vector.broadcast %123 : vector<8x1xf32> to vector<8x256xf32>
    %126 = vector.broadcast %124 : vector<1x256xf32> to vector<8x256xf32>
    %127 = arith.mulf %125, %126 : vector<8x256xf32>
    %128 = arith.addf %122, %127 : vector<8x256xf32>
    %129 = vector.extract_strided_slice %3 {offsets = [0, 7], sizes = [8, 1], strides = [1, 1]} : vector<8x8xf32> to vector<8x1xf32>
    %130 = vector.extract_strided_slice %86 {offsets = [7, 0], sizes = [1, 256], strides = [1, 1]} : vector<8x256xf32> to vector<1x256xf32>
    %131 = vector.broadcast %129 : vector<8x1xf32> to vector<8x256xf32>
    %132 = vector.broadcast %130 : vector<1x256xf32> to vector<8x256xf32>
    %133 = arith.mulf %131, %132 : vector<8x256xf32>
    %134 = arith.addf %128, %133 : vector<8x256xf32>
    %135 = vector.extract_strided_slice %134 {offsets = [0, 0], sizes = [4, 256], strides = [1, 1]} : vector<8x256xf32> to vector<4x256xf32>
    %136 = vector.extract_strided_slice %134 {offsets = [4, 0], sizes = [4, 256], strides = [1, 1]} : vector<8x256xf32> to vector<4x256xf32>
    %c25 = arith.constant 25 : index
    %c0_30 = arith.constant 0 : index
    %c0_31 = arith.constant 0 : index
    %137 = vector.load %arg3[%c25, %c0_30, %c0_31] : memref<26x4x256xf32, #tpu.memory_space<vmem>>, vector<1x4x256xf32>
    %138 = vector.shape_cast %137 : vector<1x4x256xf32> to vector<4x256xf32>
    %c34_i32 = arith.constant 34 : i32
    %139 = tpu.dynamic_rotate %136 by %c34_i32 dim 1 : vector<4x256xf32>, i32 -> vector<4x256xf32>
    %c0_32 = arith.constant 0 : index
    %c0_33 = arith.constant 0 : index
    %c0_34 = arith.constant 0 : index
    %140 = vector.load %arg3[%c0_32, %c0_33, %c0_34] : memref<26x4x256xf32, #tpu.memory_space<vmem>>, vector<1x4x256xf32>
    %141 = vector.shape_cast %140 : vector<1x4x256xf32> to vector<4x256xf32>
    %142 = arith.mulf %139, %141 : vector<4x256xf32>
    %143 = arith.addf %138, %142 : vector<4x256xf32>
    %c33_i32 = arith.constant 33 : i32
    %144 = tpu.dynamic_rotate %136 by %c33_i32 dim 1 : vector<4x256xf32>, i32 -> vector<4x256xf32>
    %c1_35 = arith.constant 1 : index
    %c0_36 = arith.constant 0 : index
    %c0_37 = arith.constant 0 : index
    %145 = vector.load %arg3[%c1_35, %c0_36, %c0_37] : memref<26x4x256xf32, #tpu.memory_space<vmem>>, vector<1x4x256xf32>
    %146 = vector.shape_cast %145 : vector<1x4x256xf32> to vector<4x256xf32>
    %147 = arith.mulf %144, %146 : vector<4x256xf32>
    %148 = arith.addf %143, %147 : vector<4x256xf32>
    %c32_i32 = arith.constant 32 : i32
    %149 = tpu.dynamic_rotate %136 by %c32_i32 dim 1 : vector<4x256xf32>, i32 -> vector<4x256xf32>
    %c2_38 = arith.constant 2 : index
    %c0_39 = arith.constant 0 : index
    %c0_40 = arith.constant 0 : index
    %150 = vector.load %arg3[%c2_38, %c0_39, %c0_40] : memref<26x4x256xf32, #tpu.memory_space<vmem>>, vector<1x4x256xf32>
    %151 = vector.shape_cast %150 : vector<1x4x256xf32> to vector<4x256xf32>
    %152 = arith.mulf %149, %151 : vector<4x256xf32>
    %153 = arith.addf %148, %152 : vector<4x256xf32>
    %c31_i32 = arith.constant 31 : i32
    %154 = tpu.dynamic_rotate %136 by %c31_i32 dim 1 : vector<4x256xf32>, i32 -> vector<4x256xf32>
    %c3_41 = arith.constant 3 : index
    %c0_42 = arith.constant 0 : index
    %c0_43 = arith.constant 0 : index
    %155 = vector.load %arg3[%c3_41, %c0_42, %c0_43] : memref<26x4x256xf32, #tpu.memory_space<vmem>>, vector<1x4x256xf32>
    %156 = vector.shape_cast %155 : vector<1x4x256xf32> to vector<4x256xf32>
    %157 = arith.mulf %154, %156 : vector<4x256xf32>
    %158 = arith.addf %153, %157 : vector<4x256xf32>
    %c30_i32 = arith.constant 30 : i32
    %159 = tpu.dynamic_rotate %136 by %c30_i32 dim 1 : vector<4x256xf32>, i32 -> vector<4x256xf32>
    %c4_44 = arith.constant 4 : index
    %c0_45 = arith.constant 0 : index
    %c0_46 = arith.constant 0 : index
    %160 = vector.load %arg3[%c4_44, %c0_45, %c0_46] : memref<26x4x256xf32, #tpu.memory_space<vmem>>, vector<1x4x256xf32>
    %161 = vector.shape_cast %160 : vector<1x4x256xf32> to vector<4x256xf32>
    %162 = arith.mulf %159, %161 : vector<4x256xf32>
    %163 = arith.addf %158, %162 : vector<4x256xf32>
    %c18_i32 = arith.constant 18 : i32
    %164 = tpu.dynamic_rotate %136 by %c18_i32 dim 1 : vector<4x256xf32>, i32 -> vector<4x256xf32>
    %c5_47 = arith.constant 5 : index
    %c0_48 = arith.constant 0 : index
    %c0_49 = arith.constant 0 : index
    %165 = vector.load %arg3[%c5_47, %c0_48, %c0_49] : memref<26x4x256xf32, #tpu.memory_space<vmem>>, vector<1x4x256xf32>
    %166 = vector.shape_cast %165 : vector<1x4x256xf32> to vector<4x256xf32>
    %167 = arith.mulf %164, %166 : vector<4x256xf32>
    %168 = arith.addf %163, %167 : vector<4x256xf32>
    %c17_i32_50 = arith.constant 17 : i32
    %169 = tpu.dynamic_rotate %136 by %c17_i32_50 dim 1 : vector<4x256xf32>, i32 -> vector<4x256xf32>
    %c6_51 = arith.constant 6 : index
    %c0_52 = arith.constant 0 : index
    %c0_53 = arith.constant 0 : index
    %170 = vector.load %arg3[%c6_51, %c0_52, %c0_53] : memref<26x4x256xf32, #tpu.memory_space<vmem>>, vector<1x4x256xf32>
    %171 = vector.shape_cast %170 : vector<1x4x256xf32> to vector<4x256xf32>
    %172 = arith.mulf %169, %171 : vector<4x256xf32>
    %173 = arith.addf %168, %172 : vector<4x256xf32>
    %c16_i32_54 = arith.constant 16 : i32
    %174 = tpu.dynamic_rotate %136 by %c16_i32_54 dim 1 : vector<4x256xf32>, i32 -> vector<4x256xf32>
    %c7_55 = arith.constant 7 : index
    %c0_56 = arith.constant 0 : index
    %c0_57 = arith.constant 0 : index
    %175 = vector.load %arg3[%c7_55, %c0_56, %c0_57] : memref<26x4x256xf32, #tpu.memory_space<vmem>>, vector<1x4x256xf32>
    %176 = vector.shape_cast %175 : vector<1x4x256xf32> to vector<4x256xf32>
    %177 = arith.mulf %174, %176 : vector<4x256xf32>
    %178 = arith.addf %173, %177 : vector<4x256xf32>
    %c15_i32_58 = arith.constant 15 : i32
    %179 = tpu.dynamic_rotate %136 by %c15_i32_58 dim 1 : vector<4x256xf32>, i32 -> vector<4x256xf32>
    %c8_59 = arith.constant 8 : index
    %c0_60 = arith.constant 0 : index
    %c0_61 = arith.constant 0 : index
    %180 = vector.load %arg3[%c8_59, %c0_60, %c0_61] : memref<26x4x256xf32, #tpu.memory_space<vmem>>, vector<1x4x256xf32>
    %181 = vector.shape_cast %180 : vector<1x4x256xf32> to vector<4x256xf32>
    %182 = arith.mulf %179, %181 : vector<4x256xf32>
    %183 = arith.addf %178, %182 : vector<4x256xf32>
    %c14_i32 = arith.constant 14 : i32
    %184 = tpu.dynamic_rotate %136 by %c14_i32 dim 1 : vector<4x256xf32>, i32 -> vector<4x256xf32>
    %c9_62 = arith.constant 9 : index
    %c0_63 = arith.constant 0 : index
    %c0_64 = arith.constant 0 : index
    %185 = vector.load %arg3[%c9_62, %c0_63, %c0_64] : memref<26x4x256xf32, #tpu.memory_space<vmem>>, vector<1x4x256xf32>
    %186 = vector.shape_cast %185 : vector<1x4x256xf32> to vector<4x256xf32>
    %187 = arith.mulf %184, %186 : vector<4x256xf32>
    %188 = arith.addf %183, %187 : vector<4x256xf32>
    %c2_i32 = arith.constant 2 : i32
    %189 = tpu.dynamic_rotate %136 by %c2_i32 dim 1 : vector<4x256xf32>, i32 -> vector<4x256xf32>
    %c10 = arith.constant 10 : index
    %c0_65 = arith.constant 0 : index
    %c0_66 = arith.constant 0 : index
    %190 = vector.load %arg3[%c10, %c0_65, %c0_66] : memref<26x4x256xf32, #tpu.memory_space<vmem>>, vector<1x4x256xf32>
    %191 = vector.shape_cast %190 : vector<1x4x256xf32> to vector<4x256xf32>
    %192 = arith.mulf %189, %191 : vector<4x256xf32>
    %193 = arith.addf %188, %192 : vector<4x256xf32>
    %c1_i32_67 = arith.constant 1 : i32
    %194 = tpu.dynamic_rotate %136 by %c1_i32_67 dim 1 : vector<4x256xf32>, i32 -> vector<4x256xf32>
    %c11 = arith.constant 11 : index
    %c0_68 = arith.constant 0 : index
    %c0_69 = arith.constant 0 : index
    %195 = vector.load %arg3[%c11, %c0_68, %c0_69] : memref<26x4x256xf32, #tpu.memory_space<vmem>>, vector<1x4x256xf32>
    %196 = vector.shape_cast %195 : vector<1x4x256xf32> to vector<4x256xf32>
    %197 = arith.mulf %194, %196 : vector<4x256xf32>
    %198 = arith.addf %193, %197 : vector<4x256xf32>
    %c12 = arith.constant 12 : index
    %c0_70 = arith.constant 0 : index
    %c0_71 = arith.constant 0 : index
    %199 = vector.load %arg3[%c12, %c0_70, %c0_71] : memref<26x4x256xf32, #tpu.memory_space<vmem>>, vector<1x4x256xf32>
    %200 = vector.shape_cast %199 : vector<1x4x256xf32> to vector<4x256xf32>
    %201 = arith.mulf %136, %200 : vector<4x256xf32>
    %202 = arith.addf %198, %201 : vector<4x256xf32>
    %c255_i32_72 = arith.constant 255 : i32
    %203 = tpu.dynamic_rotate %136 by %c255_i32_72 dim 1 : vector<4x256xf32>, i32 -> vector<4x256xf32>
    %c13 = arith.constant 13 : index
    %c0_73 = arith.constant 0 : index
    %c0_74 = arith.constant 0 : index
    %204 = vector.load %arg3[%c13, %c0_73, %c0_74] : memref<26x4x256xf32, #tpu.memory_space<vmem>>, vector<1x4x256xf32>
    %205 = vector.shape_cast %204 : vector<1x4x256xf32> to vector<4x256xf32>
    %206 = arith.mulf %203, %205 : vector<4x256xf32>
    %207 = arith.addf %202, %206 : vector<4x256xf32>
    %c254_i32 = arith.constant 254 : i32
    %208 = tpu.dynamic_rotate %136 by %c254_i32 dim 1 : vector<4x256xf32>, i32 -> vector<4x256xf32>
    %c14 = arith.constant 14 : index
    %c0_75 = arith.constant 0 : index
    %c0_76 = arith.constant 0 : index
    %209 = vector.load %arg3[%c14, %c0_75, %c0_76] : memref<26x4x256xf32, #tpu.memory_space<vmem>>, vector<1x4x256xf32>
    %210 = vector.shape_cast %209 : vector<1x4x256xf32> to vector<4x256xf32>
    %211 = arith.mulf %208, %210 : vector<4x256xf32>
    %212 = arith.addf %207, %211 : vector<4x256xf32>
    %c242_i32 = arith.constant 242 : i32
    %213 = tpu.dynamic_rotate %136 by %c242_i32 dim 1 : vector<4x256xf32>, i32 -> vector<4x256xf32>
    %c15 = arith.constant 15 : index
    %c0_77 = arith.constant 0 : index
    %c0_78 = arith.constant 0 : index
    %214 = vector.load %arg3[%c15, %c0_77, %c0_78] : memref<26x4x256xf32, #tpu.memory_space<vmem>>, vector<1x4x256xf32>
    %215 = vector.shape_cast %214 : vector<1x4x256xf32> to vector<4x256xf32>
    %216 = arith.mulf %213, %215 : vector<4x256xf32>
    %217 = arith.addf %212, %216 : vector<4x256xf32>
    %c241_i32_79 = arith.constant 241 : i32
    %218 = tpu.dynamic_rotate %136 by %c241_i32_79 dim 1 : vector<4x256xf32>, i32 -> vector<4x256xf32>
    %c16_80 = arith.constant 16 : index
    %c0_81 = arith.constant 0 : index
    %c0_82 = arith.constant 0 : index
    %219 = vector.load %arg3[%c16_80, %c0_81, %c0_82] : memref<26x4x256xf32, #tpu.memory_space<vmem>>, vector<1x4x256xf32>
    %220 = vector.shape_cast %219 : vector<1x4x256xf32> to vector<4x256xf32>
    %221 = arith.mulf %218, %220 : vector<4x256xf32>
    %222 = arith.addf %217, %221 : vector<4x256xf32>
    %c240_i32_83 = arith.constant 240 : i32
    %223 = tpu.dynamic_rotate %136 by %c240_i32_83 dim 1 : vector<4x256xf32>, i32 -> vector<4x256xf32>
    %c17 = arith.constant 17 : index
    %c0_84 = arith.constant 0 : index
    %c0_85 = arith.constant 0 : index
    %224 = vector.load %arg3[%c17, %c0_84, %c0_85] : memref<26x4x256xf32, #tpu.memory_space<vmem>>, vector<1x4x256xf32>
    %225 = vector.shape_cast %224 : vector<1x4x256xf32> to vector<4x256xf32>
    %226 = arith.mulf %223, %225 : vector<4x256xf32>
    %227 = arith.addf %222, %226 : vector<4x256xf32>
    %c239_i32_86 = arith.constant 239 : i32
    %228 = tpu.dynamic_rotate %136 by %c239_i32_86 dim 1 : vector<4x256xf32>, i32 -> vector<4x256xf32>
    %c18 = arith.constant 18 : index
    %c0_87 = arith.constant 0 : index
    %c0_88 = arith.constant 0 : index
    %229 = vector.load %arg3[%c18, %c0_87, %c0_88] : memref<26x4x256xf32, #tpu.memory_space<vmem>>, vector<1x4x256xf32>
    %230 = vector.shape_cast %229 : vector<1x4x256xf32> to vector<4x256xf32>
    %231 = arith.mulf %228, %230 : vector<4x256xf32>
    %232 = arith.addf %227, %231 : vector<4x256xf32>
    %c238_i32 = arith.constant 238 : i32
    %233 = tpu.dynamic_rotate %136 by %c238_i32 dim 1 : vector<4x256xf32>, i32 -> vector<4x256xf32>
    %c19 = arith.constant 19 : index
    %c0_89 = arith.constant 0 : index
    %c0_90 = arith.constant 0 : index
    %234 = vector.load %arg3[%c19, %c0_89, %c0_90] : memref<26x4x256xf32, #tpu.memory_space<vmem>>, vector<1x4x256xf32>
    %235 = vector.shape_cast %234 : vector<1x4x256xf32> to vector<4x256xf32>
    %236 = arith.mulf %233, %235 : vector<4x256xf32>
    %237 = arith.addf %232, %236 : vector<4x256xf32>
    %c226_i32 = arith.constant 226 : i32
    %238 = tpu.dynamic_rotate %136 by %c226_i32 dim 1 : vector<4x256xf32>, i32 -> vector<4x256xf32>
    %c20 = arith.constant 20 : index
    %c0_91 = arith.constant 0 : index
    %c0_92 = arith.constant 0 : index
    %239 = vector.load %arg3[%c20, %c0_91, %c0_92] : memref<26x4x256xf32, #tpu.memory_space<vmem>>, vector<1x4x256xf32>
    %240 = vector.shape_cast %239 : vector<1x4x256xf32> to vector<4x256xf32>
    %241 = arith.mulf %238, %240 : vector<4x256xf32>
    %242 = arith.addf %237, %241 : vector<4x256xf32>
    %c225_i32 = arith.constant 225 : i32
    %243 = tpu.dynamic_rotate %136 by %c225_i32 dim 1 : vector<4x256xf32>, i32 -> vector<4x256xf32>
    %c21 = arith.constant 21 : index
    %c0_93 = arith.constant 0 : index
    %c0_94 = arith.constant 0 : index
    %244 = vector.load %arg3[%c21, %c0_93, %c0_94] : memref<26x4x256xf32, #tpu.memory_space<vmem>>, vector<1x4x256xf32>
    %245 = vector.shape_cast %244 : vector<1x4x256xf32> to vector<4x256xf32>
    %246 = arith.mulf %243, %245 : vector<4x256xf32>
    %247 = arith.addf %242, %246 : vector<4x256xf32>
    %c224_i32 = arith.constant 224 : i32
    %248 = tpu.dynamic_rotate %136 by %c224_i32 dim 1 : vector<4x256xf32>, i32 -> vector<4x256xf32>
    %c22 = arith.constant 22 : index
    %c0_95 = arith.constant 0 : index
    %c0_96 = arith.constant 0 : index
    %249 = vector.load %arg3[%c22, %c0_95, %c0_96] : memref<26x4x256xf32, #tpu.memory_space<vmem>>, vector<1x4x256xf32>
    %250 = vector.shape_cast %249 : vector<1x4x256xf32> to vector<4x256xf32>
    %251 = arith.mulf %248, %250 : vector<4x256xf32>
    %252 = arith.addf %247, %251 : vector<4x256xf32>
    %c223_i32 = arith.constant 223 : i32
    %253 = tpu.dynamic_rotate %136 by %c223_i32 dim 1 : vector<4x256xf32>, i32 -> vector<4x256xf32>
    %c23 = arith.constant 23 : index
    %c0_97 = arith.constant 0 : index
    %c0_98 = arith.constant 0 : index
    %254 = vector.load %arg3[%c23, %c0_97, %c0_98] : memref<26x4x256xf32, #tpu.memory_space<vmem>>, vector<1x4x256xf32>
    %255 = vector.shape_cast %254 : vector<1x4x256xf32> to vector<4x256xf32>
    %256 = arith.mulf %253, %255 : vector<4x256xf32>
    %257 = arith.addf %252, %256 : vector<4x256xf32>
    %c222_i32 = arith.constant 222 : i32
    %258 = tpu.dynamic_rotate %136 by %c222_i32 dim 1 : vector<4x256xf32>, i32 -> vector<4x256xf32>
    %c24_99 = arith.constant 24 : index
    %c0_100 = arith.constant 0 : index
    %c0_101 = arith.constant 0 : index
    %259 = vector.load %arg3[%c24_99, %c0_100, %c0_101] : memref<26x4x256xf32, #tpu.memory_space<vmem>>, vector<1x4x256xf32>
    %260 = vector.shape_cast %259 : vector<1x4x256xf32> to vector<4x256xf32>
    %261 = arith.mulf %258, %260 : vector<4x256xf32>
    %262 = arith.addf %257, %261 : vector<4x256xf32>
    %c25_102 = arith.constant 25 : index
    %c0_103 = arith.constant 0 : index
    %c0_104 = arith.constant 0 : index
    %263 = vector.load %arg4[%c25_102, %c0_103, %c0_104] : memref<26x4x256xf32, #tpu.memory_space<vmem>>, vector<1x4x256xf32>
    %264 = vector.shape_cast %263 : vector<1x4x256xf32> to vector<4x256xf32>
    %c102_i32 = arith.constant 102 : i32
    %265 = tpu.dynamic_rotate %262 by %c102_i32 dim 1 : vector<4x256xf32>, i32 -> vector<4x256xf32>
    %c0_105 = arith.constant 0 : index
    %c0_106 = arith.constant 0 : index
    %c0_107 = arith.constant 0 : index
    %266 = vector.load %arg4[%c0_105, %c0_106, %c0_107] : memref<26x4x256xf32, #tpu.memory_space<vmem>>, vector<1x4x256xf32>
    %267 = vector.shape_cast %266 : vector<1x4x256xf32> to vector<4x256xf32>
    %268 = arith.mulf %265, %267 : vector<4x256xf32>
    %269 = arith.addf %264, %268 : vector<4x256xf32>
    %c99_i32 = arith.constant 99 : i32
    %270 = tpu.dynamic_rotate %262 by %c99_i32 dim 1 : vector<4x256xf32>, i32 -> vector<4x256xf32>
    %c1_108 = arith.constant 1 : index
    %c0_109 = arith.constant 0 : index
    %c0_110 = arith.constant 0 : index
    %271 = vector.load %arg4[%c1_108, %c0_109, %c0_110] : memref<26x4x256xf32, #tpu.memory_space<vmem>>, vector<1x4x256xf32>
    %272 = vector.shape_cast %271 : vector<1x4x256xf32> to vector<4x256xf32>
    %273 = arith.mulf %270, %272 : vector<4x256xf32>
    %274 = arith.addf %269, %273 : vector<4x256xf32>
    %c96_i32 = arith.constant 96 : i32
    %275 = tpu.dynamic_rotate %262 by %c96_i32 dim 1 : vector<4x256xf32>, i32 -> vector<4x256xf32>
    %c2_111 = arith.constant 2 : index
    %c0_112 = arith.constant 0 : index
    %c0_113 = arith.constant 0 : index
    %276 = vector.load %arg4[%c2_111, %c0_112, %c0_113] : memref<26x4x256xf32, #tpu.memory_space<vmem>>, vector<1x4x256xf32>
    %277 = vector.shape_cast %276 : vector<1x4x256xf32> to vector<4x256xf32>
    %278 = arith.mulf %275, %277 : vector<4x256xf32>
    %279 = arith.addf %274, %278 : vector<4x256xf32>
    %c93_i32 = arith.constant 93 : i32
    %280 = tpu.dynamic_rotate %262 by %c93_i32 dim 1 : vector<4x256xf32>, i32 -> vector<4x256xf32>
    %c3_114 = arith.constant 3 : index
    %c0_115 = arith.constant 0 : index
    %c0_116 = arith.constant 0 : index
    %281 = vector.load %arg4[%c3_114, %c0_115, %c0_116] : memref<26x4x256xf32, #tpu.memory_space<vmem>>, vector<1x4x256xf32>
    %282 = vector.shape_cast %281 : vector<1x4x256xf32> to vector<4x256xf32>
    %283 = arith.mulf %280, %282 : vector<4x256xf32>
    %284 = arith.addf %279, %283 : vector<4x256xf32>
    %c90_i32 = arith.constant 90 : i32
    %285 = tpu.dynamic_rotate %262 by %c90_i32 dim 1 : vector<4x256xf32>, i32 -> vector<4x256xf32>
    %c4_117 = arith.constant 4 : index
    %c0_118 = arith.constant 0 : index
    %c0_119 = arith.constant 0 : index
    %286 = vector.load %arg4[%c4_117, %c0_118, %c0_119] : memref<26x4x256xf32, #tpu.memory_space<vmem>>, vector<1x4x256xf32>
    %287 = vector.shape_cast %286 : vector<1x4x256xf32> to vector<4x256xf32>
    %288 = arith.mulf %285, %287 : vector<4x256xf32>
    %289 = arith.addf %284, %288 : vector<4x256xf32>
    %c54_i32 = arith.constant 54 : i32
    %290 = tpu.dynamic_rotate %262 by %c54_i32 dim 1 : vector<4x256xf32>, i32 -> vector<4x256xf32>
    %c5_120 = arith.constant 5 : index
    %c0_121 = arith.constant 0 : index
    %c0_122 = arith.constant 0 : index
    %291 = vector.load %arg4[%c5_120, %c0_121, %c0_122] : memref<26x4x256xf32, #tpu.memory_space<vmem>>, vector<1x4x256xf32>
    %292 = vector.shape_cast %291 : vector<1x4x256xf32> to vector<4x256xf32>
    %293 = arith.mulf %290, %292 : vector<4x256xf32>
    %294 = arith.addf %289, %293 : vector<4x256xf32>
    %c51_i32 = arith.constant 51 : i32
    %295 = tpu.dynamic_rotate %262 by %c51_i32 dim 1 : vector<4x256xf32>, i32 -> vector<4x256xf32>
    %c6_123 = arith.constant 6 : index
    %c0_124 = arith.constant 0 : index
    %c0_125 = arith.constant 0 : index
    %296 = vector.load %arg4[%c6_123, %c0_124, %c0_125] : memref<26x4x256xf32, #tpu.memory_space<vmem>>, vector<1x4x256xf32>
    %297 = vector.shape_cast %296 : vector<1x4x256xf32> to vector<4x256xf32>
    %298 = arith.mulf %295, %297 : vector<4x256xf32>
    %299 = arith.addf %294, %298 : vector<4x256xf32>
    %c48_i32 = arith.constant 48 : i32
    %300 = tpu.dynamic_rotate %262 by %c48_i32 dim 1 : vector<4x256xf32>, i32 -> vector<4x256xf32>
    %c7_126 = arith.constant 7 : index
    %c0_127 = arith.constant 0 : index
    %c0_128 = arith.constant 0 : index
    %301 = vector.load %arg4[%c7_126, %c0_127, %c0_128] : memref<26x4x256xf32, #tpu.memory_space<vmem>>, vector<1x4x256xf32>
    %302 = vector.shape_cast %301 : vector<1x4x256xf32> to vector<4x256xf32>
    %303 = arith.mulf %300, %302 : vector<4x256xf32>
    %304 = arith.addf %299, %303 : vector<4x256xf32>
    %c45_i32 = arith.constant 45 : i32
    %305 = tpu.dynamic_rotate %262 by %c45_i32 dim 1 : vector<4x256xf32>, i32 -> vector<4x256xf32>
    %c8_129 = arith.constant 8 : index
    %c0_130 = arith.constant 0 : index
    %c0_131 = arith.constant 0 : index
    %306 = vector.load %arg4[%c8_129, %c0_130, %c0_131] : memref<26x4x256xf32, #tpu.memory_space<vmem>>, vector<1x4x256xf32>
    %307 = vector.shape_cast %306 : vector<1x4x256xf32> to vector<4x256xf32>
    %308 = arith.mulf %305, %307 : vector<4x256xf32>
    %309 = arith.addf %304, %308 : vector<4x256xf32>
    %c42_i32 = arith.constant 42 : i32
    %310 = tpu.dynamic_rotate %262 by %c42_i32 dim 1 : vector<4x256xf32>, i32 -> vector<4x256xf32>
    %c9_132 = arith.constant 9 : index
    %c0_133 = arith.constant 0 : index
    %c0_134 = arith.constant 0 : index
    %311 = vector.load %arg4[%c9_132, %c0_133, %c0_134] : memref<26x4x256xf32, #tpu.memory_space<vmem>>, vector<1x4x256xf32>
    %312 = vector.shape_cast %311 : vector<1x4x256xf32> to vector<4x256xf32>
    %313 = arith.mulf %310, %312 : vector<4x256xf32>
    %314 = arith.addf %309, %313 : vector<4x256xf32>
    %c6_i32 = arith.constant 6 : i32
    %315 = tpu.dynamic_rotate %262 by %c6_i32 dim 1 : vector<4x256xf32>, i32 -> vector<4x256xf32>
    %c10_135 = arith.constant 10 : index
    %c0_136 = arith.constant 0 : index
    %c0_137 = arith.constant 0 : index
    %316 = vector.load %arg4[%c10_135, %c0_136, %c0_137] : memref<26x4x256xf32, #tpu.memory_space<vmem>>, vector<1x4x256xf32>
    %317 = vector.shape_cast %316 : vector<1x4x256xf32> to vector<4x256xf32>
    %318 = arith.mulf %315, %317 : vector<4x256xf32>
    %319 = arith.addf %314, %318 : vector<4x256xf32>
    %c3_i32 = arith.constant 3 : i32
    %320 = tpu.dynamic_rotate %262 by %c3_i32 dim 1 : vector<4x256xf32>, i32 -> vector<4x256xf32>
    %c11_138 = arith.constant 11 : index
    %c0_139 = arith.constant 0 : index
    %c0_140 = arith.constant 0 : index
    %321 = vector.load %arg4[%c11_138, %c0_139, %c0_140] : memref<26x4x256xf32, #tpu.memory_space<vmem>>, vector<1x4x256xf32>
    %322 = vector.shape_cast %321 : vector<1x4x256xf32> to vector<4x256xf32>
    %323 = arith.mulf %320, %322 : vector<4x256xf32>
    %324 = arith.addf %319, %323 : vector<4x256xf32>
    %c12_141 = arith.constant 12 : index
    %c0_142 = arith.constant 0 : index
    %c0_143 = arith.constant 0 : index
    %325 = vector.load %arg4[%c12_141, %c0_142, %c0_143] : memref<26x4x256xf32, #tpu.memory_space<vmem>>, vector<1x4x256xf32>
    %326 = vector.shape_cast %325 : vector<1x4x256xf32> to vector<4x256xf32>
    %327 = arith.mulf %262, %326 : vector<4x256xf32>
    %328 = arith.addf %324, %327 : vector<4x256xf32>
    %c253_i32 = arith.constant 253 : i32
    %329 = tpu.dynamic_rotate %262 by %c253_i32 dim 1 : vector<4x256xf32>, i32 -> vector<4x256xf32>
    %c13_144 = arith.constant 13 : index
    %c0_145 = arith.constant 0 : index
    %c0_146 = arith.constant 0 : index
    %330 = vector.load %arg4[%c13_144, %c0_145, %c0_146] : memref<26x4x256xf32, #tpu.memory_space<vmem>>, vector<1x4x256xf32>
    %331 = vector.shape_cast %330 : vector<1x4x256xf32> to vector<4x256xf32>
    %332 = arith.mulf %329, %331 : vector<4x256xf32>
    %333 = arith.addf %328, %332 : vector<4x256xf32>
    %c250_i32 = arith.constant 250 : i32
    %334 = tpu.dynamic_rotate %262 by %c250_i32 dim 1 : vector<4x256xf32>, i32 -> vector<4x256xf32>
    %c14_147 = arith.constant 14 : index
    %c0_148 = arith.constant 0 : index
    %c0_149 = arith.constant 0 : index
    %335 = vector.load %arg4[%c14_147, %c0_148, %c0_149] : memref<26x4x256xf32, #tpu.memory_space<vmem>>, vector<1x4x256xf32>
    %336 = vector.shape_cast %335 : vector<1x4x256xf32> to vector<4x256xf32>
    %337 = arith.mulf %334, %336 : vector<4x256xf32>
    %338 = arith.addf %333, %337 : vector<4x256xf32>
    %c214_i32 = arith.constant 214 : i32
    %339 = tpu.dynamic_rotate %262 by %c214_i32 dim 1 : vector<4x256xf32>, i32 -> vector<4x256xf32>
    %c15_150 = arith.constant 15 : index
    %c0_151 = arith.constant 0 : index
    %c0_152 = arith.constant 0 : index
    %340 = vector.load %arg4[%c15_150, %c0_151, %c0_152] : memref<26x4x256xf32, #tpu.memory_space<vmem>>, vector<1x4x256xf32>
    %341 = vector.shape_cast %340 : vector<1x4x256xf32> to vector<4x256xf32>
    %342 = arith.mulf %339, %341 : vector<4x256xf32>
    %343 = arith.addf %338, %342 : vector<4x256xf32>
    %c211_i32 = arith.constant 211 : i32
    %344 = tpu.dynamic_rotate %262 by %c211_i32 dim 1 : vector<4x256xf32>, i32 -> vector<4x256xf32>
    %c16_153 = arith.constant 16 : index
    %c0_154 = arith.constant 0 : index
    %c0_155 = arith.constant 0 : index
    %345 = vector.load %arg4[%c16_153, %c0_154, %c0_155] : memref<26x4x256xf32, #tpu.memory_space<vmem>>, vector<1x4x256xf32>
    %346 = vector.shape_cast %345 : vector<1x4x256xf32> to vector<4x256xf32>
    %347 = arith.mulf %344, %346 : vector<4x256xf32>
    %348 = arith.addf %343, %347 : vector<4x256xf32>
    %c208_i32 = arith.constant 208 : i32
    %349 = tpu.dynamic_rotate %262 by %c208_i32 dim 1 : vector<4x256xf32>, i32 -> vector<4x256xf32>
    %c17_156 = arith.constant 17 : index
    %c0_157 = arith.constant 0 : index
    %c0_158 = arith.constant 0 : index
    %350 = vector.load %arg4[%c17_156, %c0_157, %c0_158] : memref<26x4x256xf32, #tpu.memory_space<vmem>>, vector<1x4x256xf32>
    %351 = vector.shape_cast %350 : vector<1x4x256xf32> to vector<4x256xf32>
    %352 = arith.mulf %349, %351 : vector<4x256xf32>
    %353 = arith.addf %348, %352 : vector<4x256xf32>
    %c205_i32 = arith.constant 205 : i32
    %354 = tpu.dynamic_rotate %262 by %c205_i32 dim 1 : vector<4x256xf32>, i32 -> vector<4x256xf32>
    %c18_159 = arith.constant 18 : index
    %c0_160 = arith.constant 0 : index
    %c0_161 = arith.constant 0 : index
    %355 = vector.load %arg4[%c18_159, %c0_160, %c0_161] : memref<26x4x256xf32, #tpu.memory_space<vmem>>, vector<1x4x256xf32>
    %356 = vector.shape_cast %355 : vector<1x4x256xf32> to vector<4x256xf32>
    %357 = arith.mulf %354, %356 : vector<4x256xf32>
    %358 = arith.addf %353, %357 : vector<4x256xf32>
    %c202_i32 = arith.constant 202 : i32
    %359 = tpu.dynamic_rotate %262 by %c202_i32 dim 1 : vector<4x256xf32>, i32 -> vector<4x256xf32>
    %c19_162 = arith.constant 19 : index
    %c0_163 = arith.constant 0 : index
    %c0_164 = arith.constant 0 : index
    %360 = vector.load %arg4[%c19_162, %c0_163, %c0_164] : memref<26x4x256xf32, #tpu.memory_space<vmem>>, vector<1x4x256xf32>
    %361 = vector.shape_cast %360 : vector<1x4x256xf32> to vector<4x256xf32>
    %362 = arith.mulf %359, %361 : vector<4x256xf32>
    %363 = arith.addf %358, %362 : vector<4x256xf32>
    %c166_i32 = arith.constant 166 : i32
    %364 = tpu.dynamic_rotate %262 by %c166_i32 dim 1 : vector<4x256xf32>, i32 -> vector<4x256xf32>
    %c20_165 = arith.constant 20 : index
    %c0_166 = arith.constant 0 : index
    %c0_167 = arith.constant 0 : index
    %365 = vector.load %arg4[%c20_165, %c0_166, %c0_167] : memref<26x4x256xf32, #tpu.memory_space<vmem>>, vector<1x4x256xf32>
    %366 = vector.shape_cast %365 : vector<1x4x256xf32> to vector<4x256xf32>
    %367 = arith.mulf %364, %366 : vector<4x256xf32>
    %368 = arith.addf %363, %367 : vector<4x256xf32>
    %c163_i32 = arith.constant 163 : i32
    %369 = tpu.dynamic_rotate %262 by %c163_i32 dim 1 : vector<4x256xf32>, i32 -> vector<4x256xf32>
    %c21_168 = arith.constant 21 : index
    %c0_169 = arith.constant 0 : index
    %c0_170 = arith.constant 0 : index
    %370 = vector.load %arg4[%c21_168, %c0_169, %c0_170] : memref<26x4x256xf32, #tpu.memory_space<vmem>>, vector<1x4x256xf32>
    %371 = vector.shape_cast %370 : vector<1x4x256xf32> to vector<4x256xf32>
    %372 = arith.mulf %369, %371 : vector<4x256xf32>
    %373 = arith.addf %368, %372 : vector<4x256xf32>
    %c160_i32 = arith.constant 160 : i32
    %374 = tpu.dynamic_rotate %262 by %c160_i32 dim 1 : vector<4x256xf32>, i32 -> vector<4x256xf32>
    %c22_171 = arith.constant 22 : index
    %c0_172 = arith.constant 0 : index
    %c0_173 = arith.constant 0 : index
    %375 = vector.load %arg4[%c22_171, %c0_172, %c0_173] : memref<26x4x256xf32, #tpu.memory_space<vmem>>, vector<1x4x256xf32>
    %376 = vector.shape_cast %375 : vector<1x4x256xf32> to vector<4x256xf32>
    %377 = arith.mulf %374, %376 : vector<4x256xf32>
    %378 = arith.addf %373, %377 : vector<4x256xf32>
    %c157_i32 = arith.constant 157 : i32
    %379 = tpu.dynamic_rotate %262 by %c157_i32 dim 1 : vector<4x256xf32>, i32 -> vector<4x256xf32>
    %c23_174 = arith.constant 23 : index
    %c0_175 = arith.constant 0 : index
    %c0_176 = arith.constant 0 : index
    %380 = vector.load %arg4[%c23_174, %c0_175, %c0_176] : memref<26x4x256xf32, #tpu.memory_space<vmem>>, vector<1x4x256xf32>
    %381 = vector.shape_cast %380 : vector<1x4x256xf32> to vector<4x256xf32>
    %382 = arith.mulf %379, %381 : vector<4x256xf32>
    %383 = arith.addf %378, %382 : vector<4x256xf32>
    %c154_i32 = arith.constant 154 : i32
    %384 = tpu.dynamic_rotate %262 by %c154_i32 dim 1 : vector<4x256xf32>, i32 -> vector<4x256xf32>
    %c24_177 = arith.constant 24 : index
    %c0_178 = arith.constant 0 : index
    %c0_179 = arith.constant 0 : index
    %385 = vector.load %arg4[%c24_177, %c0_178, %c0_179] : memref<26x4x256xf32, #tpu.memory_space<vmem>>, vector<1x4x256xf32>
    %386 = vector.shape_cast %385 : vector<1x4x256xf32> to vector<4x256xf32>
    %387 = arith.mulf %384, %386 : vector<4x256xf32>
    %388 = arith.addf %383, %387 : vector<4x256xf32>
    %389 = arith.mulf %135, %388 : vector<4x256xf32>
    %390 = arith.addf %389, %1 : vector<4x256xf32>
    %c0_180 = arith.constant 0 : index
    %c0_181 = arith.constant 0 : index
    %c0_182 = arith.constant 0 : index
    %391 = vector.load %arg6[%c0_180, %c0_181, %c0_182] : memref<1x4x256xf32, #tpu.memory_space<vmem>>, vector<1x4x256xf32>
    %392 = vector.shape_cast %391 : vector<1x4x256xf32> to vector<4x256xf32>
    %393 = vector.shape_cast %390 : vector<4x256xf32> to vector<1x4x256xf32>
    tpu.vector_store %arg6[%c0_180, %c0_181, %c0_182], %393 {strides = array<i32>} : memref<1x4x256xf32, #tpu.memory_space<vmem>>, vector<1x4x256xf32>,
    return
  }
  func.func @transform_0(%arg0: i32) -> (i32, i32, i32) {
    %c0_i32 = arith.constant 0 : i32
    %c0_i32_0 = arith.constant 0 : i32
    %c0_i32_1 = arith.constant 0 : i32
    return %arg0, %c0_i32, %c0_i32_0 : i32, i32, i32
  }
  func.func @transform_1(%arg0: i32) -> (i32, i32, i32) {
    %c0_i32 = arith.constant 0 : i32
    %c0_i32_0 = arith.constant 0 : i32
    %c0_i32_1 = arith.constant 0 : i32
    %c0_i32_2 = arith.constant 0 : i32
    return %c0_i32, %c0_i32_0, %c0_i32_1 : i32, i32, i32
  }
  func.func @transform_2(%arg0: i32) -> (i32, i32, i32) {
    %c0_i32 = arith.constant 0 : i32
    %c0_i32_0 = arith.constant 0 : i32
    %c0_i32_1 = arith.constant 0 : i32
    %c0_i32_2 = arith.constant 0 : i32
    return %c0_i32, %c0_i32_0, %c0_i32_1 : i32, i32, i32
  }
  func.func @transform_3(%arg0: i32) -> (i32, i32, i32) {
    %c0_i32 = arith.constant 0 : i32
    %c0_i32_0 = arith.constant 0 : i32
    %c0_i32_1 = arith.constant 0 : i32
    %c0_i32_2 = arith.constant 0 : i32
    return %c0_i32, %c0_i32_0, %c0_i32_1 : i32, i32, i32
  }
  func.func @transform_4(%arg0: i32) -> (i32, i32) {
    %c0_i32 = arith.constant 0 : i32
    %c0_i32_0 = arith.constant 0 : i32
    %c0_i32_1 = arith.constant 0 : i32
    return %c0_i32, %c0_i32_0 : i32, i32
  }
  func.func @transform_5(%arg0: i32) -> (i32, i32, i32) {
    %c0_i32 = arith.constant 0 : i32
    %c0_i32_0 = arith.constant 0 : i32
    %c0_i32_1 = arith.constant 0 : i32
    return %arg0, %c0_i32, %c0_i32_0 : i32, i32, i32
  }
}

</mosaic_0001>

<llo_original>
// kernel: tpu_custom_call.1
$region0: #{tpu_custom_call.1}
  #allocation0 [shape = 'u32[]', space=smem, size = 0x4, offset = 0x4, fixed_abs, tag = 'smem constant byte address 0x4 - core index']
  #allocation1 [shape = 'u32[144,128]{1,0:T(1,128)}', space=vmem, size = 0x12000, scoped, tag = 'internal scratch']
  %s0 = inlined_call_operand.hbm [shape: f32[2,4,256], index: 0, kind: input, shape index: {}]
  %s1 = inlined_call_operand.hbm [shape: f32[10,16,256], index: 1, kind: input, shape index: {}]
  %s2 = inlined_call_operand.hbm [shape: f32[26,4,256], index: 2, kind: input, shape index: {}]
  %s3 = inlined_call_operand.hbm [shape: f32[26,4,256], index: 3, kind: input, shape index: {}]
  %s4 = inlined_call_operand.hbm [shape: f32[48,256], index: 4, kind: input, shape index: {}]
  %s5 = inlined_call_operand.hbm [shape: f32[2,4,256], index: 5, kind: output, shape index: {}]
  %s6 = sld [smem:[#allocation0]]
  $region73: #{tpu_custom_call.1} parent=0
    _
  %s8 = ssub.s32 1, %s6
  %s9 = scalar_select 0, %s8, %s6
  $region1: #{tpu_custom_call.1} parent=0
    #allocation2 [shape = 'u8[8192]{0}', space=vmem, size = 0x2000, scoped, tag = 'input window, operand 0']
    #allocation3 [shape = 's32[2]{0}', space=sflag, size = 0x8, scoped, tag = 'scoped memory for tpu_custom_call.1']
    #allocation4 [shape = 's32[2]{0}', space=sflag, size = 0x8, scoped, tag = 'scoped memory for tpu_custom_call.1']
    #allocation5 [shape = 'u8[163840]{0}', space=vmem, size = 0x28000, scoped, tag = 'input window, operand 1, single buffered']
    #allocation6 [shape = 's32[1]{0}', space=sflag, size = 0x4, scoped, tag = 'scoped memory for tpu_custom_call.1']
    #allocation7 [shape = 'u8[106496]{0}', space=vmem, size = 0x1a000, scoped, tag = 'input window, operand 2, single buffered']
    #allocation8 [shape = 'u8[106496]{0}', space=vmem, size = 0x1a000, scoped, tag = 'input window, operand 3, single buffered']
    #allocation9 [shape = 's32[1]{0}', space=sflag, size = 0x4, scoped, tag = 'scoped memory for tpu_custom_call.1']
    #allocation10 [shape = 'u8[49152]{0}', space=vmem, size = 0xc000, scoped, tag = 'input window, operand 4, single buffered']
    #allocation11 [shape = 'u8[8192]{0}', space=vmem, size = 0x2000, scoped, tag = 'output window, operand 0']
    %10 = vsyncpa [#allocation3], 0
    %s11 = scalar_lea.sflag [#allocation3], 1
    %12 = vsyncpa %s11, 0
    %13 = vsyncpa [#allocation6], 0
    %14 = vsyncpa [#allocation9], 0
    %15 = vsyncpa [#allocation4], 0
    %s16 = scalar_lea.sflag [#allocation4], 1
    %17 = vsyncpa %s16, 0
    loop: start=0, step=1, limit=4
    $region2: #{tpu_custom_call.1} parent=1 // loop_pre_header
      _
    $region3: #{tpu_custom_call.1} parent=1 // loop_header
      %s19 = sphi 0, %s23
      %p20 = scmp.ge.s32.totalorder %s19, 4
      %s29 = sphi 0, %s31
      %s32 = sphi 0, %s29
      %s33 = sphi 0, %s32
      %s49 = sphi 0, %s33
      %s53 = sphi 0, %s53
      %s55 = sphi 0, %s53
      %s56 = sphi 0, %s55
      %s70 = sphi 0, %s56
      %s74 = sphi 0, %s74
      %s76 = sphi 0, %s74
      %s77 = sphi 0, %s76
      %s91 = sphi 0, %s77
      %s95 = sphi 0, %s95
      %s97 = sphi 0, %s95
      %s98 = sphi 0, %s97
      %s112 = sphi 0, %s98
      %s116 = sphi 0, %s116
      %s118 = sphi 0, %s116
      %s119 = sphi 0, %s118
      %s133 = sphi 0, %s119
      %s139 = sphi 0, %s141
      %s142 = sphi 0, %s139
      %s143 = sphi 0, %s142
      %s159 = sphi 0, %s143
    $region4: #{tpu_custom_call.1} parent=1 // loop_header_branch
      %22 = sbr.rel (%p20) target = $region8
    $region5: #{tpu_custom_call.1} parent=1 // loop_body
      %s24 = ssub.s32 %s19, 1
      %s25 = ssub.s32 %s19, 2
      %s26 = sadd.s32 %s19, 1
      %s27 = ssub.s32 %s19, %s26
      %p28 = scmp.eq.s32.totalorder %s27, 0
      %s30 = sadd.s32 %s29, 1
      %s31 = scalar_select %p28, %s29, %s30
      %p34 = pneg %p28
      %p35 = scmp.eq.s32.totalorder %s19, 1
      %p36 = por %p34, %p35
      %p37 = scmp.ne.s32.totalorder %s29, %s32
      %p38 = scmp.eq.s32.totalorder %s19, 0
      %p39 = por %p37, %p38
      %p40 = scmp.ne.s32.totalorder %s29, %s32
      %p41 = scmp.eq.s32.totalorder %s24, 1
      %p42 = por %p40, %p41
      %p43 = scmp.ne.s32.totalorder %s32, %s33
      %p44 = scmp.eq.s32.totalorder %s24, 0
      %p45 = por %p43, %p44
      %p46 = scmp.ne.s32.totalorder %s32, %s33
      %p47 = scmp.eq.s32.totalorder %s25, 1
      %p48 = por %p46, %p47
      %p50 = scmp.ne.s32.totalorder %s33, %s49
      %p51 = scmp.eq.s32.totalorder %s25, 0
      %p52 = por %p50, %p51
      %s54 = sadd.s32 %s53, 1
      %p57 = scmp.eq.s32.totalorder %s19, 1
      %p58 = scmp.ne.s32.totalorder %s53, %s55
      %p59 = scmp.eq.s32.totalorder %s19, 0
      %p60 = por %p58, %p59
      %p61 = scmp.ne.s32.totalorder %s53, %s55
      %p62 = scmp.eq.s32.totalorder %s24, 1
      %p63 = por %p61, %p62
      %p64 = scmp.ne.s32.totalorder %s55, %s56
      %p65 = scmp.eq.s32.totalorder %s24, 0
      %p66 = por %p64, %p65
      %p67 = scmp.ne.s32.totalorder %s55, %s56
      %p68 = scmp.eq.s32.totalorder %s25, 1
      %p69 = por %p67, %p68
      %p71 = scmp.ne.s32.totalorder %s56, %s70
      %p72 = scmp.eq.s32.totalorder %s25, 0
      %p73 = por %p71, %p72
      %s75 = sadd.s32 %s74, 1
      %p78 = scmp.eq.s32.totalorder %s19, 1
      %p79 = scmp.ne.s32.totalorder %s74, %s76
      %p80 = scmp.eq.s32.totalorder %s19, 0
      %p81 = por %p79, %p80
      %p82 = scmp.ne.s32.totalorder %s74, %s76
      %p83 = scmp.eq.s32.totalorder %s24, 1
      %p84 = por %p82, %p83
      %p85 = scmp.ne.s32.totalorder %s76, %s77
      %p86 = scmp.eq.s32.totalorder %s24, 0
      %p87 = por %p85, %p86
      %p88 = scmp.ne.s32.totalorder %s76, %s77
      %p89 = scmp.eq.s32.totalorder %s25, 1
      %p90 = por %p88, %p89
      %p92 = scmp.ne.s32.totalorder %s77, %s91
      %p93 = scmp.eq.s32.totalorder %s25, 0
      %p94 = por %p92, %p93
      %s96 = sadd.s32 %s95, 1
      %p99 = scmp.eq.s32.totalorder %s19, 1
      %p100 = scmp.ne.s32.totalorder %s95, %s97
      %p101 = scmp.eq.s32.totalorder %s19, 0
      %p102 = por %p100, %p101
      %p103 = scmp.ne.s32.totalorder %s95, %s97
      %p104 = scmp.eq.s32.totalorder %s24, 1
      %p105 = por %p103, %p104
      %p106 = scmp.ne.s32.totalorder %s97, %s98
      %p107 = scmp.eq.s32.totalorder %s24, 0
      %p108 = por %p106, %p107
      %p109 = scmp.ne.s32.totalorder %s97, %s98
      %p110 = scmp.eq.s32.totalorder %s25, 1
      %p111 = por %p109, %p110
      %p113 = scmp.ne.s32.totalorder %s98, %s112
      %p114 = scmp.eq.s32.totalorder %s25, 0
      %p115 = por %p113, %p114
      %s117 = sadd.s32 %s116, 1
      %p120 = scmp.eq.s32.totalorder %s19, 1
      %p121 = scmp.ne.s32.totalorder %s116, %s118
      %p122 = scmp.eq.s32.totalorder %s19, 0
      %p123 = por %p121, %p122
      %p124 = scmp.ne.s32.totalorder %s116, %s118
      %p125 = scmp.eq.s32.totalorder %s24, 1
      %p126 = por %p124, %p125
      %p127 = scmp.ne.s32.totalorder %s118, %s119
      %p128 = scmp.eq.s32.totalorder %s24, 0
      %p129 = por %p127, %p128
      %p130 = scmp.ne.s32.totalorder %s118, %s119
      %p131 = scmp.eq.s32.totalorder %s25, 1
      %p132 = por %p130, %p131
      %p134 = scmp.ne.s32.totalorder %s119, %s133
      %p135 = scmp.eq.s32.totalorder %s25, 0
      %p136 = por %p134, %p135
      %s137 = ssub.s32 %s19, %s26
      %p138 = scmp.eq.s32.totalorder %s137, 0
      %s140 = sadd.s32 %s139, 1
      %s141 = scalar_select %p138, %s139, %s140
      %p144 = pneg %p138
      %p145 = scmp.eq.s32.totalorder %s19, 1
      %p146 = por %p144, %p145
      %p147 = scmp.ne.s32.totalorder %s139, %s142
      %p148 = scmp.eq.s32.totalorder %s19, 0
      %p149 = por %p147, %p148
      %p150 = scmp.ne.s32.totalorder %s139, %s142
      %p151 = scmp.eq.s32.totalorder %s24, 1
      %p152 = por %p150, %p151
      %p153 = scmp.ne.s32.totalorder %s142, %s143
      %p154 = scmp.eq.s32.totalorder %s24, 0
      %p155 = por %p153, %p154
      %p156 = scmp.ne.s32.totalorder %s142, %s143
      %p157 = scmp.eq.s32.totalorder %s25, 1
      %p158 = por %p156, %p157
      %p160 = scmp.ne.s32.totalorder %s143, %s159
      %p161 = scmp.eq.s32.totalorder %s25, 0
      %p162 = por %p160, %p161
      %p163 = scmp.le.s32.totalorder 1, %s19
      %p164 = scmp.lt.s32.totalorder %s19, 3
      %p165 = pnand %p163, %p164
      %p166 = pneg %p165
      // Predicated region
      $region9: #{tpu_custom_call.1} parent=5 // pred_check
        _
      $region10: #{tpu_custom_call.1} parent=5 // pred_check_branch
        %168 = sbr.rel (%p165) target = $region12
      $region11: #{tpu_custom_call.1} parent=5 // pred_region
        %s169 = ssub.s32 %s19, 1
        // Predicated region
        $region13: #{tpu_custom_call.1} parent=11 // pred_check
          %p170 = pneg %p66
        $region14: #{tpu_custom_call.1} parent=11 // pred_check_branch
          %172 = sbr.rel (%p170) target = $region16
        $region15: #{tpu_custom_call.1} parent=11 // pred_region
          %s174 = ssub.s32 5120, 5120
          %175 = vsyncadd [#allocation6], %s174
          %s176 = sshll.u32 [#allocation5], 4
          %s177 = int_to_ptr.vmem [resolvable:$true] %s176
          %182 = dma.hbm_to_vmem [thread:$0]  %s1, 5120, %s177, [#allocation6], 256, 256, 16
        $region16: #{tpu_custom_call.1} parent=11 // pred_fallthru
          _
        // Predicated region
        $region17: #{tpu_custom_call.1} parent=11 // pred_check
          %p183 = pneg %p87
        $region18: #{tpu_custom_call.1} parent=11 // pred_check_branch
          %185 = sbr.rel (%p183) target = $region20
        $region19: #{tpu_custom_call.1} parent=11 // pred_region
          %s187 = ssub.s32 3328, 3328
          %188 = vsyncadd [#allocation6], %s187
          %s189 = sshll.u32 [#allocation7], 4
          %s190 = int_to_ptr.vmem [resolvable:$true] %s189
          %195 = dma.hbm_to_vmem [thread:$0]  %s2, 3328, %s190, [#allocation6], 128, 128, 8
        $region20: #{tpu_custom_call.1} parent=11 // pred_fallthru
          _
        // Predicated region
        $region21: #{tpu_custom_call.1} parent=11 // pred_check
          %p196 = pneg %p108
        $region22: #{tpu_custom_call.1} parent=11 // pred_check_branch
          %198 = sbr.rel (%p196) target = $region24
        $region23: #{tpu_custom_call.1} parent=11 // pred_region
          %s200 = ssub.s32 3328, 3328
          %201 = vsyncadd [#allocation9], %s200
          %s202 = sshll.u32 [#allocation8], 4
          %s203 = int_to_ptr.vmem [resolvable:$true] %s202
          %208 = dma.hbm_to_vmem [thread:$0]  %s3, 3328, %s203, [#allocation9], 128, 128, 8
        $region24: #{tpu_custom_call.1} parent=11 // pred_fallthru
          _
        // Predicated region
        $region25: #{tpu_custom_call.1} parent=11 // pred_check
          %p209 = pneg %p129
        $region26: #{tpu_custom_call.1} parent=11 // pred_check_branch
          %211 = sbr.rel (%p209) target = $region28
        $region27: #{tpu_custom_call.1} parent=11 // pred_region
          %s213 = ssub.s32 1536, 1536
          %214 = vsyncadd [#allocation9], %s213
          %s215 = sshll.u32 [#allocation10], 4
          %s216 = int_to_ptr.vmem [resolvable:$true] %s215
          %221 = dma.hbm_to_vmem [thread:$0]  %s4, 1536, %s216, [#allocation9], 256, 256, 16
        $region28: #{tpu_custom_call.1} parent=11 // pred_fallthru
          _
      $region12: #{tpu_custom_call.1} parent=5 // pred_fallthru
        _
      %p222 = scmp.lt.s32.totalorder %s19, 2
      // Predicated region
      $region29: #{tpu_custom_call.1} parent=5 // pred_check
        %p223 = pneg %p222
      $region30: #{tpu_custom_call.1} parent=5 // pred_check_branch
        %225 = sbr.rel (%p223) target = $region32
      $region31: #{tpu_custom_call.1} parent=5 // pred_region
        // Predicated region
        $region33: #{tpu_custom_call.1} parent=31 // pred_check
          %p226 = pneg %p39
        $region34: #{tpu_custom_call.1} parent=31 // pred_check_branch
          %228 = sbr.rel (%p226) target = $region36
        $region35: #{tpu_custom_call.1} parent=31 // pred_region
          %s229 = sand.u32 %s29, 1
          %s230 = scalar_lea.sflag [#allocation3], %s229
          %s231 = sand.u32 %s29, 1
          %s232 = smul.addr %s231, 8
          %s233 = scalar_lea.vmem [#allocation2], %s232
          %s235 = ssub.s32 128, 128
          %236 = vsyncadd %s230, %s235
          %s237 = smul.addr %s19, 2
          %s238 = smul.addr %s237, 64
          %s239 = scalar_lea.hbm %s0, %s238
          %s241 = sshll.u32 %s233, 4
          %s242 = int_to_ptr.vmem [resolvable:$true] %s241
          %244 = dma.hbm_to_vmem [thread:$0]  %s239, 128, %s242, %s230
        $region36: #{tpu_custom_call.1} parent=31 // pred_fallthru
          _
      $region32: #{tpu_custom_call.1} parent=5 // pred_fallthru
        _
      %p245 = scmp.le.s32.totalorder 1, %s19
      %p246 = scmp.lt.s32.totalorder %s19, 3
      %p247 = pnand %p245, %p246
      %p248 = pneg %p247
      // Predicated region
      $region37: #{tpu_custom_call.1} parent=5 // pred_check
        _
      $region38: #{tpu_custom_call.1} parent=5 // pred_check_branch
        %250 = sbr.rel (%p247) target = $region40
      $region39: #{tpu_custom_call.1} parent=5 // pred_region
        %s251 = ssub.s32 %s19, 1
        %s252 = sand.u32 %s32, 1
        %s253 = scalar_lea.sflag [#allocation3], %s252
        %s254 = sand.u32 %s32, 1
        %s255 = smul.addr %s254, 8
        %s256 = scalar_lea.vmem [#allocation2], %s255
        // Predicated region
        $region41: #{tpu_custom_call.1} parent=39 // pred_check
          %p257 = pneg %p45
        $region42: #{tpu_custom_call.1} parent=39 // pred_check_branch
          %259 = sbr.rel (%p257) target = $region44
        $region43: #{tpu_custom_call.1} parent=39 // pred_region
          %260 = dma.done %s253, 128
        $region44: #{tpu_custom_call.1} parent=39 // pred_fallthru
          _
        // Predicated region
        $region45: #{tpu_custom_call.1} parent=39 // pred_check
          %p261 = pneg %p66
        $region46: #{tpu_custom_call.1} parent=39 // pred_check_branch
          %263 = sbr.rel (%p261) target = $region48
        $region47: #{tpu_custom_call.1} parent=39 // pred_region
          %264 = dma.done [#allocation6], 5120
        $region48: #{tpu_custom_call.1} parent=39 // pred_fallthru
          _
        // Predicated region
        $region49: #{tpu_custom_call.1} parent=39 // pred_check
          %p265 = pneg %p87
        $region50: #{tpu_custom_call.1} parent=39 // pred_check_branch
          %267 = sbr.rel (%p265) target = $region52
        $region51: #{tpu_custom_call.1} parent=39 // pred_region
          %268 = dma.done [#allocation6], 3328
        $region52: #{tpu_custom_call.1} parent=39 // pred_fallthru
          _
        // Predicated region
        $region53: #{tpu_custom_call.1} parent=39 // pred_check
          %p269 = pneg %p108
        $region54: #{tpu_custom_call.1} parent=39 // pred_check_branch
          %271 = sbr.rel (%p269) target = $region56
        $region55: #{tpu_custom_call.1} parent=39 // pred_region
          %272 = dma.done [#allocation9], 3328
        $region56: #{tpu_custom_call.1} parent=39 // pred_fallthru
          _
        // Predicated region
        $region57: #{tpu_custom_call.1} parent=39 // pred_check
          %p273 = pneg %p129
        $region58: #{tpu_custom_call.1} parent=39 // pred_check_branch
          %275 = sbr.rel (%p273) target = $region60
        $region59: #{tpu_custom_call.1} parent=39 // pred_region
          %276 = dma.done [#allocation9], 1536
        $region60: #{tpu_custom_call.1} parent=39 // pred_fallthru
          _
        %s277 = sand.u32 %s32, 1
        %s278 = scalar_lea.sflag [#allocation3], %s277
        %s279 = sand.u32 %s32, 1
        %s280 = smul.addr %s279, 8
        %s281 = scalar_lea.vmem [#allocation2], %s280
        %p282 = pneg %p45
        %p283 = pneg %p42
        %p284 = pneg %p66
        %p285 = pneg %p63
        %p286 = pneg %p87
        %p287 = pneg %p84
        %p288 = pneg %p108
        %p289 = pneg %p105
        %p290 = pneg %p129
        %p291 = pneg %p126
        %p292 = pneg %p155
        %p293 = pneg %p152
        %s294 = sand.u32 %s142, 1
        %s295 = scalar_lea.sflag [#allocation4], %s294
        %s296 = sand.u32 %s142, 1
        %s297 = smul.addr %s296, 8
        %s298 = scalar_lea.vmem [#allocation11], %s297
        %v299 = vld [vmem:[%s256] sm:$0xff]
        %v300 = vld [vmem:[#allocation10] sm:$0xff]
        %v301 = vld [vmem:[#allocation10 + $0x10] sm:$0xff]
        %v302 = vld [vmem:[#allocation10 + $0x20] sm:$0xff]
        %v303 = vld [vmem:[#allocation10 + $0x30] sm:$0xff]
        %v304 = vld [vmem:[#allocation10 + $0x38] sm:$0xff]
        %v305 = vld [vmem:[#allocation10 + $0x40] sm:$0xff]
        %v306 = vld [vmem:[#allocation10 + $0x48] sm:$0xff]
        %v307 = vld [vmem:[#allocation10 + $0x50] sm:$0xff]
        %v308 = vld [vmem:[#allocation10 + $0x58] sm:$0xff]
        %310 = vset.pattern.permute.xlu0 0
        %311 = vperm.xlu0 %310, %v300
        %v312 = vpop.permute.xlu0 %311
        %315 = vset.pattern.permute.xlu0 0
        %316 = vperm.xlu0 %315, %v301
        %v317 = vpop.permute.xlu0 %316
        %v320 = vlaneseq
        %v321 = vshrl.u32 %v320, 7
        %v322 = vsub.s32 0, %v321
        %v323 = vrot.slane %v299, %v322
        %v324 = vlaneseq
        %v325 = vshrl.u32 %v324, 7
        %v326 = vsub.s32 4, %v325
        %v327 = vrot.slane %v299, %v326
        %v330 = vlaneseq
        %v331 = vshrl.u32 %v330, 7
        %v332 = vsub.s32 0, %v331
        %v333 = vrot.slane %v323, %v332
        %v334 = vlaneseq
        %v335 = vshrl.u32 %v334, 7
        %v336 = vsub.s32 0, %v335
        %v337 = vrot.slane %v327, %v336
        %v338 = vmul.f32 %v312, %v333
        %v339 = vmul.f32 %v312, %v337
        %v340 = vmul.f32 %v317, %v333
        %v341 = vmul.f32 %v317, %v337
        %v342 = vadd.f32 %v303, %v338
        %v343 = vadd.f32 %v304, %v339
        %v344 = vadd.f32 %v305, %v340
        %v345 = vadd.f32 %v306, %v341
        %346 = vset.pattern.permute.xlu0 1
        %347 = vperm.xlu0 %346, %v300
        %v348 = vpop.permute.xlu0 %347
        %350 = vset.pattern.permute.xlu0 1
        %351 = vperm.xlu0 %350, %v301
        %v352 = vpop.permute.xlu0 %351
        %v354 = vlaneseq
        %v355 = vshrl.u32 %v354, 7
        %v356 = vsub.s32 1, %v355
        %v357 = vrot.slane %v299, %v356
        %v358 = vlaneseq
        %v359 = vshrl.u32 %v358, 7
        %v360 = vsub.s32 5, %v359
        %v361 = vrot.slane %v299, %v360
        %v364 = vlaneseq
        %v365 = vshrl.u32 %v364, 7
        %v366 = vsub.s32 1, %v365
        %v367 = vrot.slane %v357, %v366
        %v368 = vlaneseq
        %v369 = vshrl.u32 %v368, 7
        %v370 = vsub.s32 1, %v369
        %v371 = vrot.slane %v361, %v370
        %v372 = vmul.f32 %v348, %v367
        %v373 = vmul.f32 %v348, %v371
        %v374 = vmul.f32 %v352, %v367
        %v375 = vmul.f32 %v352, %v371
        %v376 = vadd.f32 %v342, %v372
        %v377 = vadd.f32 %v343, %v373
        %v378 = vadd.f32 %v344, %v374
        %v379 = vadd.f32 %v345, %v375
        %380 = vset.pattern.permute.xlu0 2
        %381 = vperm.xlu0 %380, %v300
        %v382 = vpop.permute.xlu0 %381
        %384 = vset.pattern.permute.xlu0 2
        %385 = vperm.xlu0 %384, %v301
        %v386 = vpop.permute.xlu0 %385
        %v388 = vlaneseq
        %v389 = vshrl.u32 %v388, 7
        %v390 = vsub.s32 2, %v389
        %v391 = vrot.slane %v299, %v390
        %v392 = vlaneseq
        %v393 = vshrl.u32 %v392, 7
        %v394 = vsub.s32 6, %v393
        %v395 = vrot.slane %v299, %v394
        %v398 = vlaneseq
        %v399 = vshrl.u32 %v398, 7
        %v400 = vsub.s32 2, %v399
        %v401 = vrot.slane %v391, %v400
        %v402 = vlaneseq
        %v403 = vshrl.u32 %v402, 7
        %v404 = vsub.s32 2, %v403
        %v405 = vrot.slane %v395, %v404
        %v406 = vmul.f32 %v382, %v401
        %v407 = vmul.f32 %v382, %v405
        %v408 = vmul.f32 %v386, %v401
        %v409 = vmul.f32 %v386, %v405
        %v410 = vadd.f32 %v376, %v406
        %v411 = vadd.f32 %v377, %v407
        %v412 = vadd.f32 %v378, %v408
        %v413 = vadd.f32 %v379, %v409
        %414 = vset.pattern.permute.xlu0 3
        %415 = vperm.xlu0 %414, %v300
        %v416 = vpop.permute.xlu0 %415
        %418 = vset.pattern.permute.xlu0 3
        %419 = vperm.xlu0 %418, %v301
        %v420 = vpop.permute.xlu0 %419
        %v422 = vlaneseq
        %v423 = vshrl.u32 %v422, 7
        %v424 = vsub.s32 3, %v423
        %v425 = vrot.slane %v299, %v424
        %v426 = vlaneseq
        %v427 = vshrl.u32 %v426, 7
        %v428 = vsub.s32 7, %v427
        %v429 = vrot.slane %v299, %v428
        %v432 = vlaneseq
        %v433 = vshrl.u32 %v432, 7
        %v434 = vsub.s32 3, %v433
        %v435 = vrot.slane %v425, %v434
        %v436 = vlaneseq
        %v437 = vshrl.u32 %v436, 7
        %v438 = vsub.s32 3, %v437
        %v439 = vrot.slane %v429, %v438
        %v440 = vmul.f32 %v416, %v435
        %v441 = vmul.f32 %v416, %v439
        %v442 = vmul.f32 %v420, %v435
        %v443 = vmul.f32 %v420, %v439
        %v444 = vadd.f32 %v410, %v440
        %v445 = vadd.f32 %v411, %v441
        %v446 = vadd.f32 %v412, %v442
        %v447 = vadd.f32 %v413, %v443
        %s448 = scalar_lea.vmem [#allocation5], 288
        %v449 = vld [vmem:[%s448] sm:$0xff]
        %v450 = vld [vmem:[%s448 + $0x8] sm:$0xff]
        %v451 = vld [vmem:[%s448 + $0x10] sm:$0xff]
        %v452 = vld [vmem:[%s448 + $0x18] sm:$0xff]
        %453 = vrot.lane.b32.xlu0 %v444, 17
        %v454 = vpop.permute.xlu0 %453
        %455 = vrot.lane.b32.xlu0 %v446, 17
        %v456 = vpop.permute.xlu0 %455
        %457 = vrot.lane.b32.xlu0 %v445, 17
        %v458 = vpop.permute.xlu0 %457
        %459 = vrot.lane.b32.xlu0 %v447, 17
        %v460 = vpop.permute.xlu0 %459
        %v461 = vlaneseq
        %v462 = vand.u32 %v461, 127
        %vm463 = vcmp.lt.s32.totalorder %v462, 17
        %v464 = vsel %vm463, %v454, %v458
        %v465 = vsel %vm463, %v456, %v460
        %v466 = vsel %vm463, %v458, %v454
        %v467 = vsel %vm463, %v460, %v456
        %v468 = vld [vmem:[#allocation5] sm:$0xff]
        %v469 = vld [vmem:[#allocation5 + $0x8] sm:$0xff]
        %v470 = vld [vmem:[#allocation5 + $0x10] sm:$0xff]
        %v471 = vld [vmem:[#allocation5 + $0x18] sm:$0xff]
        %v472 = vmul.f32 %v466, %v468
        %v473 = vmul.f32 %v464, %v469
        %v474 = vmul.f32 %v467, %v470
        %v475 = vmul.f32 %v465, %v471
        %v476 = vadd.f32 %v449, %v472
        %v477 = vadd.f32 %v450, %v473
        %v478 = vadd.f32 %v451, %v474
        %v479 = vadd.f32 %v452, %v475
        %480 = vrot.lane.b32.xlu0 %v444, 16
        %v481 = vpop.permute.xlu0 %480
        %482 = vrot.lane.b32.xlu0 %v446, 16
        %v483 = vpop.permute.xlu0 %482
        %484 = vrot.lane.b32.xlu0 %v445, 16
        %v485 = vpop.permute.xlu0 %484
        %486 = vrot.lane.b32.xlu0 %v447, 16
        %v487 = vpop.permute.xlu0 %486
        %vm488 = vcmp.lt.s32.totalorder %v462, 16
        %v489 = vsel %vm488, %v481, %v485
        %v490 = vsel %vm488, %v483, %v487
        %v491 = vsel %vm488, %v485, %v481
        %v492 = vsel %vm488, %v487, %v483
        %s493 = scalar_lea.vmem [#allocation5], 32
        %v494 = vld [vmem:[%s493] sm:$0xff]
        %v495 = vld [vmem:[%s493 + $0x8] sm:$0xff]
        %v496 = vld [vmem:[%s493 + $0x10] sm:$0xff]
        %v497 = vld [vmem:[%s493 + $0x18] sm:$0xff]
        %v498 = vmul.f32 %v491, %v494
        %v499 = vmul.f32 %v489, %v495
        %v500 = vmul.f32 %v492, %v496
        %v501 = vmul.f32 %v490, %v497
        %v502 = vadd.f32 %v476, %v498
        %v503 = vadd.f32 %v477, %v499
        %v504 = vadd.f32 %v478, %v500
        %v505 = vadd.f32 %v479, %v501
        %506 = vrot.lane.b32.xlu0 %v444, 15
        %v507 = vpop.permute.xlu0 %506
        %508 = vrot.lane.b32.xlu0 %v446, 15
        %v509 = vpop.permute.xlu0 %508
        %510 = vrot.lane.b32.xlu0 %v445, 15
        %v511 = vpop.permute.xlu0 %510
        %512 = vrot.lane.b32.xlu0 %v447, 15
        %v513 = vpop.permute.xlu0 %512
        %vm514 = vcmp.lt.s32.totalorder %v462, 15
        %v515 = vsel %vm514, %v507, %v511
        %v516 = vsel %vm514, %v509, %v513
        %v517 = vsel %vm514, %v511, %v507
        %v518 = vsel %vm514, %v513, %v509
        %s519 = scalar_lea.vmem [#allocation5], 64
        %v520 = vld [vmem:[%s519] sm:$0xff]
        %v521 = vld [vmem:[%s519 + $0x8] sm:$0xff]
        %v522 = vld [vmem:[%s519 + $0x10] sm:$0xff]
        %v523 = vld [vmem:[%s519 + $0x18] sm:$0xff]
        %v524 = vmul.f32 %v517, %v520
        %v525 = vmul.f32 %v515, %v521
        %v526 = vmul.f32 %v518, %v522
        %v527 = vmul.f32 %v516, %v523
        %v528 = vadd.f32 %v502, %v524
        %v529 = vadd.f32 %v503, %v525
        %v530 = vadd.f32 %v504, %v526
        %v531 = vadd.f32 %v505, %v527
        %532 = vrot.lane.b32.xlu0 %v444, 1
        %v533 = vpop.permute.xlu0 %532
        %534 = vrot.lane.b32.xlu0 %v446, 1
        %v535 = vpop.permute.xlu0 %534
        %536 = vrot.lane.b32.xlu0 %v445, 1
        %v537 = vpop.permute.xlu0 %536
        %538 = vrot.lane.b32.xlu0 %v447, 1
        %v539 = vpop.permute.xlu0 %538
        %vm540 = vcmp.lt.s32.totalorder %v462, 1
        %v541 = vsel %vm540, %v533, %v537
        %v542 = vsel %vm540, %v535, %v539
        %v543 = vsel %vm540, %v537, %v533
        %v544 = vsel %vm540, %v539, %v535
        %s545 = scalar_lea.vmem [#allocation5], 96
        %v546 = vld [vmem:[%s545] sm:$0xff]
        %v547 = vld [vmem:[%s545 + $0x8] sm:$0xff]
        %v548 = vld [vmem:[%s545 + $0x10] sm:$0xff]
        %v549 = vld [vmem:[%s545 + $0x18] sm:$0xff]
        %v550 = vmul.f32 %v543, %v546
        %v551 = vmul.f32 %v541, %v547
        %v552 = vmul.f32 %v544, %v548
        %v553 = vmul.f32 %v542, %v549
        %v554 = vadd.f32 %v528, %v550
        %v555 = vadd.f32 %v529, %v551
        %v556 = vadd.f32 %v530, %v552
        %v557 = vadd.f32 %v531, %v553
        %s558 = scalar_lea.vmem [#allocation5], 128
        %v559 = vld [vmem:[%s558] sm:$0xff]
        %v560 = vld [vmem:[%s558 + $0x8] sm:$0xff]
        %v561 = vld [vmem:[%s558 + $0x10] sm:$0xff]
        %v562 = vld [vmem:[%s558 + $0x18] sm:$0xff]
        %v563 = vmul.f32 %v444, %v559
        %v564 = vmul.f32 %v445, %v560
        %v565 = vmul.f32 %v446, %v561
        %v566 = vmul.f32 %v447, %v562
        %v567 = vadd.f32 %v554, %v563
        %v568 = vadd.f32 %v555, %v564
        %v569 = vadd.f32 %v556, %v565
        %v570 = vadd.f32 %v557, %v566
        %571 = vrot.lane.b32.xlu0 %v444, 127
        %v572 = vpop.permute.xlu0 %571
        %573 = vrot.lane.b32.xlu0 %v446, 127
        %v574 = vpop.permute.xlu0 %573
        %575 = vrot.lane.b32.xlu0 %v445, 127
        %v576 = vpop.permute.xlu0 %575
        %577 = vrot.lane.b32.xlu0 %v447, 127
        %v578 = vpop.permute.xlu0 %577
        %vm579 = vcmp.lt.s32.totalorder %v462, 127
        %v580 = vsel %vm579, %v572, %v576
        %v581 = vsel %vm579, %v574, %v578
        %v582 = vsel %vm579, %v576, %v572
        %v583 = vsel %vm579, %v578, %v574
        %s584 = scalar_lea.vmem [#allocation5], 160
        %v585 = vld [vmem:[%s584] sm:$0xff]
        %v586 = vld [vmem:[%s584 + $0x8] sm:$0xff]
        %v587 = vld [vmem:[%s584 + $0x10] sm:$0xff]
        %v588 = vld [vmem:[%s584 + $0x18] sm:$0xff]
        %v589 = vmul.f32 %v580, %v585
        %v590 = vmul.f32 %v582, %v586
        %v591 = vmul.f32 %v581, %v587
        %v592 = vmul.f32 %v583, %v588
        %v593 = vadd.f32 %v567, %v589
        %v594 = vadd.f32 %v568, %v590
        %v595 = vadd.f32 %v569, %v591
        %v596 = vadd.f32 %v570, %v592
        %597 = vrot.lane.b32.xlu0 %v444, 113
        %v598 = vpop.permute.xlu0 %597
        %599 = vrot.lane.b32.xlu0 %v446, 113
        %v600 = vpop.permute.xlu0 %599
        %601 = vrot.lane.b32.xlu0 %v445, 113
        %v602 = vpop.permute.xlu0 %601
        %603 = vrot.lane.b32.xlu0 %v447, 113
        %v604 = vpop.permute.xlu0 %603
        %vm605 = vcmp.lt.s32.totalorder %v462, 113
        %v606 = vsel %vm605, %v598, %v602
        %v607 = vsel %vm605, %v600, %v604
        %v608 = vsel %vm605, %v602, %v598
        %v609 = vsel %vm605, %v604, %v600
        %s610 = scalar_lea.vmem [#allocation5], 192
        %v611 = vld [vmem:[%s610] sm:$0xff]
        %v612 = vld [vmem:[%s610 + $0x8] sm:$0xff]
        %v613 = vld [vmem:[%s610 + $0x10] sm:$0xff]
        %v614 = vld [vmem:[%s610 + $0x18] sm:$0xff]
        %v615 = vmul.f32 %v606, %v611
        %v616 = vmul.f32 %v608, %v612
        %v617 = vmul.f32 %v607, %v613
        %v618 = vmul.f32 %v609, %v614
        %v619 = vadd.f32 %v593, %v615
        %v620 = vadd.f32 %v594, %v616
        %v621 = vadd.f32 %v595, %v617
        %v622 = vadd.f32 %v596, %v618
        %623 = vrot.lane.b32.xlu0 %v444, 112
        %v624 = vpop.permute.xlu0 %623
        %625 = vrot.lane.b32.xlu0 %v446, 112
        %v626 = vpop.permute.xlu0 %625
        %627 = vrot.lane.b32.xlu0 %v445, 112
        %v628 = vpop.permute.xlu0 %627
        %629 = vrot.lane.b32.xlu0 %v447, 112
        %v630 = vpop.permute.xlu0 %629
        %vm631 = vcmp.lt.s32.totalorder %v462, 112
        %v632 = vsel %vm631, %v624, %v628
        %v633 = vsel %vm631, %v626, %v630
        %v634 = vsel %vm631, %v628, %v624
        %v635 = vsel %vm631, %v630, %v626
        %s636 = scalar_lea.vmem [#allocation5], 224
        %v637 = vld [vmem:[%s636] sm:$0xff]
        %v638 = vld [vmem:[%s636 + $0x8] sm:$0xff]
        %v639 = vld [vmem:[%s636 + $0x10] sm:$0xff]
        %v640 = vld [vmem:[%s636 + $0x18] sm:$0xff]
        %v641 = vmul.f32 %v632, %v637
        %v642 = vmul.f32 %v634, %v638
        %v643 = vmul.f32 %v633, %v639
        %v644 = vmul.f32 %v635, %v640
        %v645 = vadd.f32 %v619, %v641
        %v646 = vadd.f32 %v620, %v642
        %v647 = vadd.f32 %v621, %v643
        %v648 = vadd.f32 %v622, %v644
        %649 = vrot.lane.b32.xlu0 %v444, 111
        %v650 = vpop.permute.xlu0 %649
        %651 = vrot.lane.b32.xlu0 %v446, 111
        %v652 = vpop.permute.xlu0 %651
        %653 = vrot.lane.b32.xlu0 %v445, 111
        %v654 = vpop.permute.xlu0 %653
        %655 = vrot.lane.b32.xlu0 %v447, 111
        %v656 = vpop.permute.xlu0 %655
        %vm657 = vcmp.lt.s32.totalorder %v462, 111
        %v658 = vsel %vm657, %v650, %v654
        %v659 = vsel %vm657, %v652, %v656
        %v660 = vsel %vm657, %v654, %v650
        %v661 = vsel %vm657, %v656, %v652
        %s662 = scalar_lea.vmem [#allocation5], 256
        %v663 = vld [vmem:[%s662] sm:$0xff]
        %v664 = vld [vmem:[%s662 + $0x8] sm:$0xff]
        %v665 = vld [vmem:[%s662 + $0x10] sm:$0xff]
        %v666 = vld [vmem:[%s662 + $0x18] sm:$0xff]
        %v667 = vmul.f32 %v658, %v663
        %v668 = vmul.f32 %v660, %v664
        %v669 = vmul.f32 %v659, %v665
        %v670 = vmul.f32 %v661, %v666
        %v671 = vadd.f32 %v645, %v667
        %v672 = vadd.f32 %v646, %v668
        %v673 = vadd.f32 %v647, %v669
        %v674 = vadd.f32 %v648, %v670
        %v675 = vmul.f32 %v671, 0.5
        %v676 = vmul.f32 %v672, 0.5
        %v677 = vmul.f32 %v671, 0.70710677
        %v678 = vmul.f32 %v672, 0.70710677
        %v679 = verf.f32.pop %v677
        %v680 = verf.f32.pop %v678
        %v681 = vadd.f32 %v679, 1.0
        %v682 = vadd.f32 %v680, 1.0
        %v683 = vmul.f32 %v675, %v681
        %v684 = vmul.f32 %v676, %v682
        %v685 = vmul.f32 %v683, %v673
        %v686 = vmul.f32 %v684, %v674
        %688 = vset.pattern.permute.xlu0 0
        %689 = vperm.xlu0 %688, %v302
        %v690 = vpop.permute.xlu0 %689
        %v692 = vlaneseq
        %v693 = vshrl.u32 %v692, 7
        %v694 = vsub.s32 0, %v693
        %v695 = vrot.slane %v685, %v694
        %v696 = vlaneseq
        %v697 = vshrl.u32 %v696, 7
        %v698 = vsub.s32 0, %v697
        %v699 = vrot.slane %v686, %v698
        %v700 = vmul.f32 %v690, %v695
        %v701 = vmul.f32 %v690, %v699
        %v702 = vadd.f32 %v307, %v700
        %v703 = vadd.f32 %v308, %v701
        %704 = vset.pattern.permute.xlu0 1
        %705 = vperm.xlu0 %704, %v302
        %v706 = vpop.permute.xlu0 %705
        %v708 = vlaneseq
        %v709 = vshrl.u32 %v708, 7
        %v710 = vsub.s32 1, %v709
        %v711 = vrot.slane %v685, %v710
        %v712 = vlaneseq
        %v713 = vshrl.u32 %v712, 7
        %v714 = vsub.s32 1, %v713
        %v715 = vrot.slane %v686, %v714
        %v716 = vmul.f32 %v706, %v711
        %v717 = vmul.f32 %v706, %v715
        %v718 = vadd.f32 %v702, %v716
        %v719 = vadd.f32 %v703, %v717
        %720 = vset.pattern.permute.xlu0 2
        %721 = vperm.xlu0 %720, %v302
        %v722 = vpop.permute.xlu0 %721
        %v724 = vlaneseq
        %v725 = vshrl.u32 %v724, 7
        %v726 = vsub.s32 2, %v725
        %v727 = vrot.slane %v685, %v726
        %v728 = vlaneseq
        %v729 = vshrl.u32 %v728, 7
        %v730 = vsub.s32 2, %v729
        %v731 = vrot.slane %v686, %v730
        %v732 = vmul.f32 %v722, %v727
        %v733 = vmul.f32 %v722, %v731
        %v734 = vadd.f32 %v718, %v732
        %v735 = vadd.f32 %v719, %v733
        %736 = vset.pattern.permute.xlu0 3
        %737 = vperm.xlu0 %736, %v302
        %v738 = vpop.permute.xlu0 %737
        %v740 = vlaneseq
        %v741 = vshrl.u32 %v740, 7
        %v742 = vsub.s32 3, %v741
        %v743 = vrot.slane %v685, %v742
        %v744 = vlaneseq
        %v745 = vshrl.u32 %v744, 7
        %v746 = vsub.s32 3, %v745
        %v747 = vrot.slane %v686, %v746
        %v748 = vmul.f32 %v738, %v743
        %v749 = vmul.f32 %v738, %v747
        %v750 = vadd.f32 %v734, %v748
        %v751 = vadd.f32 %v735, %v749
        %752 = vset.pattern.permute.xlu0 4
        %753 = vperm.xlu0 %752, %v302
        %v754 = vpop.permute.xlu0 %753
        %v756 = vlaneseq
        %v757 = vshrl.u32 %v756, 7
        %v758 = vsub.s32 4, %v757
        %v759 = vrot.slane %v685, %v758
        %v760 = vlaneseq
        %v761 = vshrl.u32 %v760, 7
        %v762 = vsub.s32 4, %v761
        %v763 = vrot.slane %v686, %v762
        %v764 = vmul.f32 %v754, %v759
        %v765 = vmul.f32 %v754, %v763
        %v766 = vadd.f32 %v750, %v764
        %v767 = vadd.f32 %v751, %v765
        %768 = vset.pattern.permute.xlu0 5
        %769 = vperm.xlu0 %768, %v302
        %v770 = vpop.permute.xlu0 %769
        %v772 = vlaneseq
        %v773 = vshrl.u32 %v772, 7
        %v774 = vsub.s32 5, %v773
        %v775 = vrot.slane %v685, %v774
        %v776 = vlaneseq
        %v777 = vshrl.u32 %v776, 7
        %v778 = vsub.s32 5, %v777
        %v779 = vrot.slane %v686, %v778
        %v780 = vmul.f32 %v770, %v775
        %v781 = vmul.f32 %v770, %v779
        %v782 = vadd.f32 %v766, %v780
        %v783 = vadd.f32 %v767, %v781
        %784 = vset.pattern.permute.xlu0 6
        %785 = vperm.xlu0 %784, %v302
        %v786 = vpop.permute.xlu0 %785
        %v788 = vlaneseq
        %v789 = vshrl.u32 %v788, 7
        %v790 = vsub.s32 6, %v789
        %v791 = vrot.slane %v685, %v790
        %v792 = vlaneseq
        %v793 = vshrl.u32 %v792, 7
        %v794 = vsub.s32 6, %v793
        %v795 = vrot.slane %v686, %v794
        %v796 = vmul.f32 %v786, %v791
        %v797 = vmul.f32 %v786, %v795
        %v798 = vadd.f32 %v782, %v796
        %v799 = vadd.f32 %v783, %v797
        %800 = vset.pattern.permute.xlu0 7
        %801 = vperm.xlu0 %800, %v302
        %v802 = vpop.permute.xlu0 %801
        %v804 = vlaneseq
        %v805 = vshrl.u32 %v804, 7
        %v806 = vsub.s32 7, %v805
        %v807 = vrot.slane %v685, %v806
        %v808 = vlaneseq
        %v809 = vshrl.u32 %v808, 7
        %v810 = vsub.s32 7, %v809
        %v811 = vrot.slane %v686, %v810
        %v812 = vmul.f32 %v802, %v807
        %v813 = vmul.f32 %v802, %v811
        %v814 = vadd.f32 %v798, %v812
        %v815 = vadd.f32 %v799, %v813
        %s816 = scalar_lea.vmem [#allocation7], 200
        %v817 = vld [vmem:[%s816] sm:$0xff]
        %v820 = vrot.slane %v814, 4
        %v821 = vrot.slane %v815, 4
        %824 = vrot.lane.b32.xlu0 %v820, 34
        %v825 = vpop.permute.xlu0 %824
        %826 = vrot.lane.b32.xlu0 %v821, 34
        %v827 = vpop.permute.xlu0 %826
        %vm828 = vcmp.lt.s32.totalorder %v462, 34
        %v829 = vsel %vm828, %v825, %v827
        %v830 = vsel %vm828, %v827, %v825
        %v831 = vld [vmem:[#allocation7] sm:$0xff]
        %v833 = vcombine.high %v831, %v831
        %v835 = vmul.f32 %v830, %v831
        %v836 = vmul.f32 %v829, %v833
        %v839 = vcombine.low %v835, %v836
        %v841 = vadd.f32 %v817, %v839
        %842 = vrot.lane.b32.xlu0 %v820, 33
        %v843 = vpop.permute.xlu0 %842
        %844 = vrot.lane.b32.xlu0 %v821, 33
        %v845 = vpop.permute.xlu0 %844
        %vm846 = vcmp.lt.s32.totalorder %v462, 33
        %v847 = vsel %vm846, %v843, %v845
        %v848 = vsel %vm846, %v845, %v843
        %s849 = scalar_lea.vmem [#allocation7], 8
        %v850 = vld [vmem:[%s849] sm:$0xff]
        %v852 = vcombine.high %v850, %v850
        %v854 = vmul.f32 %v848, %v850
        %v855 = vmul.f32 %v847, %v852
        %v858 = vcombine.low %v854, %v855
        %v860 = vadd.f32 %v841, %v858
        %861 = vrot.lane.b32.xlu0 %v820, 32
        %v862 = vpop.permute.xlu0 %861
        %863 = vrot.lane.b32.xlu0 %v821, 32
        %v864 = vpop.permute.xlu0 %863
        %vm865 = vcmp.lt.s32.totalorder %v462, 32
        %v866 = vsel %vm865, %v862, %v864
        %v867 = vsel %vm865, %v864, %v862
        %s868 = scalar_lea.vmem [#allocation7], 16
        %v869 = vld [vmem:[%s868] sm:$0xff]
        %v871 = vcombine.high %v869, %v869
        %v873 = vmul.f32 %v867, %v869
        %v874 = vmul.f32 %v866, %v871
        %v877 = vcombine.low %v873, %v874
        %v879 = vadd.f32 %v860, %v877
        %880 = vrot.lane.b32.xlu0 %v820, 31
        %v881 = vpop.permute.xlu0 %880
        %882 = vrot.lane.b32.xlu0 %v821, 31
        %v883 = vpop.permute.xlu0 %882
        %vm884 = vcmp.lt.s32.totalorder %v462, 31
        %v885 = vsel %vm884, %v881, %v883
        %v886 = vsel %vm884, %v883, %v881
        %s887 = scalar_lea.vmem [#allocation7], 24
        %v888 = vld [vmem:[%s887] sm:$0xff]
        %v890 = vcombine.high %v888, %v888
        %v892 = vmul.f32 %v886, %v888
        %v893 = vmul.f32 %v885, %v890
        %v896 = vcombine.low %v892, %v893
        %v898 = vadd.f32 %v879, %v896
        %899 = vrot.lane.b32.xlu0 %v820, 30
        %v900 = vpop.permute.xlu0 %899
        %901 = vrot.lane.b32.xlu0 %v821, 30
        %v902 = vpop.permute.xlu0 %901
        %vm903 = vcmp.lt.s32.totalorder %v462, 30
        %v904 = vsel %vm903, %v900, %v902
        %v905 = vsel %vm903, %v902, %v900
        %s906 = scalar_lea.vmem [#allocation7], 32
        %v907 = vld [vmem:[%s906] sm:$0xff]
        %v909 = vcombine.high %v907, %v907
        %v911 = vmul.f32 %v905, %v907
        %v912 = vmul.f32 %v904, %v909
        %v915 = vcombine.low %v911, %v912
        %v917 = vadd.f32 %v898, %v915
        %918 = vrot.lane.b32.xlu0 %v820, 18
        %v919 = vpop.permute.xlu0 %918
        %920 = vrot.lane.b32.xlu0 %v821, 18
        %v921 = vpop.permute.xlu0 %920
        %vm922 = vcmp.lt.s32.totalorder %v462, 18
        %v923 = vsel %vm922, %v919, %v921
        %v924 = vsel %vm922, %v921, %v919
        %s925 = scalar_lea.vmem [#allocation7], 40
        %v926 = vld [vmem:[%s925] sm:$0xff]
        %v928 = vcombine.high %v926, %v926
        %v930 = vmul.f32 %v924, %v926
        %v931 = vmul.f32 %v923, %v928
        %v934 = vcombine.low %v930, %v931
        %v936 = vadd.f32 %v917, %v934
        %937 = vrot.lane.b32.xlu0 %v820, 17
        %v938 = vpop.permute.xlu0 %937
        %939 = vrot.lane.b32.xlu0 %v821, 17
        %v940 = vpop.permute.xlu0 %939
        %v941 = vsel %vm463, %v938, %v940
        %v942 = vsel %vm463, %v940, %v938
        %s943 = scalar_lea.vmem [#allocation7], 48
        %v944 = vld [vmem:[%s943] sm:$0xff]
        %v946 = vcombine.high %v944, %v944
        %v948 = vmul.f32 %v942, %v944
        %v949 = vmul.f32 %v941, %v946
        %v952 = vcombine.low %v948, %v949
        %v954 = vadd.f32 %v936, %v952
        %955 = vrot.lane.b32.xlu0 %v820, 16
        %v956 = vpop.permute.xlu0 %955
        %957 = vrot.lane.b32.xlu0 %v821, 16
        %v958 = vpop.permute.xlu0 %957
        %v959 = vsel %vm488, %v956, %v958
        %v960 = vsel %vm488, %v958, %v956
        %s961 = scalar_lea.vmem [#allocation7], 56
        %v962 = vld [vmem:[%s961] sm:$0xff]
        %v964 = vcombine.high %v962, %v962
        %v966 = vmul.f32 %v960, %v962
        %v967 = vmul.f32 %v959, %v964
        %v970 = vcombine.low %v966, %v967
        %v972 = vadd.f32 %v954, %v970
        %973 = vrot.lane.b32.xlu0 %v820, 15
        %v974 = vpop.permute.xlu0 %973
        %975 = vrot.lane.b32.xlu0 %v821, 15
        %v976 = vpop.permute.xlu0 %975
        %v977 = vsel %vm514, %v974, %v976
        %v978 = vsel %vm514, %v976, %v974
        %s979 = scalar_lea.vmem [#allocation7], 64
        %v980 = vld [vmem:[%s979] sm:$0xff]
        %v982 = vcombine.high %v980, %v980
        %v984 = vmul.f32 %v978, %v980
        %v985 = vmul.f32 %v977, %v982
        %v988 = vcombine.low %v984, %v985
        %v990 = vadd.f32 %v972, %v988
        %991 = vrot.lane.b32.xlu0 %v820, 14
        %v992 = vpop.permute.xlu0 %991
        %993 = vrot.lane.b32.xlu0 %v821, 14
        %v994 = vpop.permute.xlu0 %993
        %vm995 = vcmp.lt.s32.totalorder %v462, 14
        %v996 = vsel %vm995, %v992, %v994
        %v997 = vsel %vm995, %v994, %v992
        %s998 = scalar_lea.vmem [#allocation7], 72
        %v999 = vld [vmem:[%s998] sm:$0xff]
        %v1001 = vcombine.high %v999, %v999
        %v1003 = vmul.f32 %v997, %v999
        %v1004 = vmul.f32 %v996, %v1001
        %v1007 = vcombine.low %v1003, %v1004
        %v1009 = vadd.f32 %v990, %v1007
        %1010 = vrot.lane.b32.xlu0 %v820, 2
        %v1011 = vpop.permute.xlu0 %1010
        %1012 = vrot.lane.b32.xlu0 %v821, 2
        %v1013 = vpop.permute.xlu0 %1012
        %vm1014 = vcmp.lt.s32.totalorder %v462, 2
        %v1015 = vsel %vm1014, %v1011, %v1013
        %v1016 = vsel %vm1014, %v1013, %v1011
        %s1017 = scalar_lea.vmem [#allocation7], 80
        %v1018 = vld [vmem:[%s1017] sm:$0xff]
        %v1020 = vcombine.high %v1018, %v1018
        %v1022 = vmul.f32 %v1016, %v1018
        %v1023 = vmul.f32 %v1015, %v1020
        %v1026 = vcombine.low %v1022, %v1023
        %v1028 = vadd.f32 %v1009, %v1026
        %1029 = vrot.lane.b32.xlu0 %v820, 1
        %v1030 = vpop.permute.xlu0 %1029
        %1031 = vrot.lane.b32.xlu0 %v821, 1
        %v1032 = vpop.permute.xlu0 %1031
        %v1033 = vsel %vm540, %v1030, %v1032
        %v1034 = vsel %vm540, %v1032, %v1030
        %s1035 = scalar_lea.vmem [#allocation7], 88
        %v1036 = vld [vmem:[%s1035] sm:$0xff]
        %v1038 = vcombine.high %v1036, %v1036
        %v1040 = vmul.f32 %v1034, %v1036
        %v1041 = vmul.f32 %v1033, %v1038
        %v1044 = vcombine.low %v1040, %v1041
        %v1046 = vadd.f32 %v1028, %v1044
        %s1047 = scalar_lea.vmem [#allocation7], 96
        %v1048 = vld [vmem:[%s1047] sm:$0xff]
        %v1050 = vcombine.low %v1048, %v1048
        %v1052 = vmul.f32 %v814, %v1050
        %v1053 = vmul.f32 %v815, %v1048
        %v1056 = vcombine.high %v1052, %v1053
        %v1058 = vadd.f32 %v1046, %v1056
        %1059 = vrot.lane.b32.xlu0 %v820, 127
        %v1060 = vpop.permute.xlu0 %1059
        %1061 = vrot.lane.b32.xlu0 %v821, 127
        %v1062 = vpop.permute.xlu0 %1061
        %v1063 = vsel %vm579, %v1060, %v1062
        %v1064 = vsel %vm579, %v1062, %v1060
        %s1065 = scalar_lea.vmem [#allocation7], 104
        %v1066 = vld [vmem:[%s1065] sm:$0xff]
        %v1068 = vcombine.high %v1066, %v1066
        %v1070 = vmul.f32 %v1063, %v1066
        %v1071 = vmul.f32 %v1064, %v1068
        %v1074 = vcombine.low %v1070, %v1071
        %v1076 = vadd.f32 %v1058, %v1074
        %1077 = vrot.lane.b32.xlu0 %v820, 126
        %v1078 = vpop.permute.xlu0 %1077
        %1079 = vrot.lane.b32.xlu0 %v821, 126
        %v1080 = vpop.permute.xlu0 %1079
        %vm1081 = vcmp.lt.s32.totalorder %v462, 126
        %v1082 = vsel %vm1081, %v1078, %v1080
        %v1083 = vsel %vm1081, %v1080, %v1078
        %s1084 = scalar_lea.vmem [#allocation7], 112
        %v1085 = vld [vmem:[%s1084] sm:$0xff]
        %v1087 = vcombine.high %v1085, %v1085
        %v1089 = vmul.f32 %v1082, %v1085
        %v1090 = vmul.f32 %v1083, %v1087
        %v1093 = vcombine.low %v1089, %v1090
        %v1095 = vadd.f32 %v1076, %v1093
        %1096 = vrot.lane.b32.xlu0 %v820, 114
        %v1097 = vpop.permute.xlu0 %1096
        %1098 = vrot.lane.b32.xlu0 %v821, 114
        %v1099 = vpop.permute.xlu0 %1098
        %vm1100 = vcmp.lt.s32.totalorder %v462, 114
        %v1101 = vsel %vm1100, %v1097, %v1099
        %v1102 = vsel %vm1100, %v1099, %v1097
        %s1103 = scalar_lea.vmem [#allocation7], 120
        %v1104 = vld [vmem:[%s1103] sm:$0xff]
        %v1106 = vcombine.high %v1104, %v1104
        %v1108 = vmul.f32 %v1101, %v1104
        %v1109 = vmul.f32 %v1102, %v1106
        %v1112 = vcombine.low %v1108, %v1109
        %v1114 = vadd.f32 %v1095, %v1112
        %1115 = vrot.lane.b32.xlu0 %v820, 113
        %v1116 = vpop.permute.xlu0 %1115
        %1117 = vrot.lane.b32.xlu0 %v821, 113
        %v1118 = vpop.permute.xlu0 %1117
        %v1119 = vsel %vm605, %v1116, %v1118
        %v1120 = vsel %vm605, %v1118, %v1116
        %s1121 = scalar_lea.vmem [#allocation7], 128
        %v1122 = vld [vmem:[%s1121] sm:$0xff]
        %v1124 = vcombine.high %v1122, %v1122
        %v1126 = vmul.f32 %v1119, %v1122
        %v1127 = vmul.f32 %v1120, %v1124
        %v1130 = vcombine.low %v1126, %v1127
        %v1132 = vadd.f32 %v1114, %v1130
        %1133 = vrot.lane.b32.xlu0 %v820, 112
        %v1134 = vpop.permute.xlu0 %1133
        %1135 = vrot.lane.b32.xlu0 %v821, 112
        %v1136 = vpop.permute.xlu0 %1135
        %v1137 = vsel %vm631, %v1134, %v1136
        %v1138 = vsel %vm631, %v1136, %v1134
        %s1139 = scalar_lea.vmem [#allocation7], 136
        %v1140 = vld [vmem:[%s1139] sm:$0xff]
        %v1142 = vcombine.high %v1140, %v1140
        %v1144 = vmul.f32 %v1137, %v1140
        %v1145 = vmul.f32 %v1138, %v1142
        %v1148 = vcombine.low %v1144, %v1145
        %v1150 = vadd.f32 %v1132, %v1148
        %1151 = vrot.lane.b32.xlu0 %v820, 111
        %v1152 = vpop.permute.xlu0 %1151
        %1153 = vrot.lane.b32.xlu0 %v821, 111
        %v1154 = vpop.permute.xlu0 %1153
        %v1155 = vsel %vm657, %v1152, %v1154
        %v1156 = vsel %vm657, %v1154, %v1152
        %s1157 = scalar_lea.vmem [#allocation7], 144
        %v1158 = vld [vmem:[%s1157] sm:$0xff]
        %v1160 = vcombine.high %v1158, %v1158
        %v1162 = vmul.f32 %v1155, %v1158
        %v1163 = vmul.f32 %v1156, %v1160
        %v1166 = vcombine.low %v1162, %v1163
        %v1168 = vadd.f32 %v1150, %v1166
        %1169 = vrot.lane.b32.xlu0 %v820, 110
        %v1170 = vpop.permute.xlu0 %1169
        %1171 = vrot.lane.b32.xlu0 %v821, 110
        %v1172 = vpop.permute.xlu0 %1171
        %vm1173 = vcmp.lt.s32.totalorder %v462, 110
        %v1174 = vsel %vm1173, %v1170, %v1172
        %v1175 = vsel %vm1173, %v1172, %v1170
        %s1176 = scalar_lea.vmem [#allocation7], 152
        %v1177 = vld [vmem:[%s1176] sm:$0xff]
        %v1179 = vcombine.high %v1177, %v1177
        %v1181 = vmul.f32 %v1174, %v1177
        %v1182 = vmul.f32 %v1175, %v1179
        %v1185 = vcombine.low %v1181, %v1182
        %v1187 = vadd.f32 %v1168, %v1185
        %1188 = vrot.lane.b32.xlu0 %v820, 98
        %v1189 = vpop.permute.xlu0 %1188
        %1190 = vrot.lane.b32.xlu0 %v821, 98
        %v1191 = vpop.permute.xlu0 %1190
        %vm1192 = vcmp.lt.s32.totalorder %v462, 98
        %v1193 = vsel %vm1192, %v1189, %v1191
        %v1194 = vsel %vm1192, %v1191, %v1189
        %s1195 = scalar_lea.vmem [#allocation7], 160
        %v1196 = vld [vmem:[%s1195] sm:$0xff]
        %v1198 = vcombine.high %v1196, %v1196
        %v1200 = vmul.f32 %v1193, %v1196
        %v1201 = vmul.f32 %v1194, %v1198
        %v1204 = vcombine.low %v1200, %v1201
        %v1206 = vadd.f32 %v1187, %v1204
        %1207 = vrot.lane.b32.xlu0 %v820, 97
        %v1208 = vpop.permute.xlu0 %1207
        %1209 = vrot.lane.b32.xlu0 %v821, 97
        %v1210 = vpop.permute.xlu0 %1209
        %vm1211 = vcmp.lt.s32.totalorder %v462, 97
        %v1212 = vsel %vm1211, %v1208, %v1210
        %v1213 = vsel %vm1211, %v1210, %v1208
        %s1214 = scalar_lea.vmem [#allocation7], 168
        %v1215 = vld [vmem:[%s1214] sm:$0xff]
        %v1217 = vcombine.high %v1215, %v1215
        %v1219 = vmul.f32 %v1212, %v1215
        %v1220 = vmul.f32 %v1213, %v1217
        %v1223 = vcombine.low %v1219, %v1220
        %v1225 = vadd.f32 %v1206, %v1223
        %1226 = vrot.lane.b32.xlu0 %v820, 96
        %v1227 = vpop.permute.xlu0 %1226
        %1228 = vrot.lane.b32.xlu0 %v821, 96
        %v1229 = vpop.permute.xlu0 %1228
        %vm1230 = vcmp.lt.s32.totalorder %v462, 96
        %v1231 = vsel %vm1230, %v1227, %v1229
        %v1232 = vsel %vm1230, %v1229, %v1227
        %s1233 = scalar_lea.vmem [#allocation7], 176
        %v1234 = vld [vmem:[%s1233] sm:$0xff]
        %v1236 = vcombine.high %v1234, %v1234
        %v1238 = vmul.f32 %v1231, %v1234
        %v1239 = vmul.f32 %v1232, %v1236
        %v1242 = vcombine.low %v1238, %v1239
        %v1244 = vadd.f32 %v1225, %v1242
        %1245 = vrot.lane.b32.xlu0 %v820, 95
        %v1246 = vpop.permute.xlu0 %1245
        %1247 = vrot.lane.b32.xlu0 %v821, 95
        %v1248 = vpop.permute.xlu0 %1247
        %vm1249 = vcmp.lt.s32.totalorder %v462, 95
        %v1250 = vsel %vm1249, %v1246, %v1248
        %v1251 = vsel %vm1249, %v1248, %v1246
        %s1252 = scalar_lea.vmem [#allocation7], 184
        %v1253 = vld [vmem:[%s1252] sm:$0xff]
        %v1255 = vcombine.high %v1253, %v1253
        %v1257 = vmul.f32 %v1250, %v1253
        %v1258 = vmul.f32 %v1251, %v1255
        %v1261 = vcombine.low %v1257, %v1258
        %v1263 = vadd.f32 %v1244, %v1261
        %1264 = vrot.lane.b32.xlu0 %v820, 94
        %v1265 = vpop.permute.xlu0 %1264
        %1266 = vrot.lane.b32.xlu0 %v821, 94
        %v1267 = vpop.permute.xlu0 %1266
        %vm1268 = vcmp.lt.s32.totalorder %v462, 94
        %v1269 = vsel %vm1268, %v1265, %v1267
        %v1270 = vsel %vm1268, %v1267, %v1265
        %s1271 = scalar_lea.vmem [#allocation7], 192
        %v1272 = vld [vmem:[%s1271] sm:$0xff]
        %v1274 = vcombine.high %v1272, %v1272
        %v1276 = vmul.f32 %v1269, %v1272
        %v1277 = vmul.f32 %v1270, %v1274
        %v1280 = vcombine.low %v1276, %v1277
        %v1282 = vadd.f32 %v1263, %v1280
        %s1283 = scalar_lea.vmem [#allocation8], 200
        %v1284 = vld [vmem:[%s1283] sm:$0xff]
        %v1286 = vcombine.high %v1282, %v1282
        %1288 = vrot.lane.b32.xlu0 %v1282, 102
        %v1289 = vpop.permute.xlu0 %1288
        %1290 = vrot.lane.b32.xlu0 %v1286, 102
        %v1291 = vpop.permute.xlu0 %1290
        %vm1292 = vcmp.lt.s32.totalorder %v462, 102
        %v1293 = vsel %vm1292, %v1289, %v1291
        %v1294 = vsel %vm1292, %v1291, %v1289
        %v1295 = vld [vmem:[#allocation8] sm:$0xff]
        %v1297 = vcombine.high %v1295, %v1295
        %v1299 = vmul.f32 %v1294, %v1295
        %v1300 = vmul.f32 %v1293, %v1297
        %v1303 = vcombine.low %v1299, %v1300
        %v1305 = vadd.f32 %v1284, %v1303
        %1306 = vrot.lane.b32.xlu0 %v1282, 99
        %v1307 = vpop.permute.xlu0 %1306
        %1308 = vrot.lane.b32.xlu0 %v1286, 99
        %v1309 = vpop.permute.xlu0 %1308
        %vm1310 = vcmp.lt.s32.totalorder %v462, 99
        %v1311 = vsel %vm1310, %v1307, %v1309
        %v1312 = vsel %vm1310, %v1309, %v1307
        %s1313 = scalar_lea.vmem [#allocation8], 8
        %v1314 = vld [vmem:[%s1313] sm:$0xff]
        %v1316 = vcombine.high %v1314, %v1314
        %v1318 = vmul.f32 %v1312, %v1314
        %v1319 = vmul.f32 %v1311, %v1316
        %v1322 = vcombine.low %v1318, %v1319
        %v1324 = vadd.f32 %v1305, %v1322
        %1325 = vrot.lane.b32.xlu0 %v1282, 96
        %v1326 = vpop.permute.xlu0 %1325
        %1327 = vrot.lane.b32.xlu0 %v1286, 96
        %v1328 = vpop.permute.xlu0 %1327
        %v1329 = vsel %vm1230, %v1326, %v1328
        %v1330 = vsel %vm1230, %v1328, %v1326
        %s1331 = scalar_lea.vmem [#allocation8], 16
        %v1332 = vld [vmem:[%s1331] sm:$0xff]
        %v1334 = vcombine.high %v1332, %v1332
        %v1336 = vmul.f32 %v1330, %v1332
        %v1337 = vmul.f32 %v1329, %v1334
        %v1340 = vcombine.low %v1336, %v1337
        %v1342 = vadd.f32 %v1324, %v1340
        %1343 = vrot.lane.b32.xlu0 %v1282, 93
        %v1344 = vpop.permute.xlu0 %1343
        %1345 = vrot.lane.b32.xlu0 %v1286, 93
        %v1346 = vpop.permute.xlu0 %1345
        %vm1347 = vcmp.lt.s32.totalorder %v462, 93
        %v1348 = vsel %vm1347, %v1344, %v1346
        %v1349 = vsel %vm1347, %v1346, %v1344
        %s1350 = scalar_lea.vmem [#allocation8], 24
        %v1351 = vld [vmem:[%s1350] sm:$0xff]
        %v1353 = vcombine.high %v1351, %v1351
        %v1355 = vmul.f32 %v1349, %v1351
        %v1356 = vmul.f32 %v1348, %v1353
        %v1359 = vcombine.low %v1355, %v1356
        %v1361 = vadd.f32 %v1342, %v1359
        %1362 = vrot.lane.b32.xlu0 %v1282, 90
        %v1363 = vpop.permute.xlu0 %1362
        %1364 = vrot.lane.b32.xlu0 %v1286, 90
        %v1365 = vpop.permute.xlu0 %1364
        %vm1366 = vcmp.lt.s32.totalorder %v462, 90
        %v1367 = vsel %vm1366, %v1363, %v1365
        %v1368 = vsel %vm1366, %v1365, %v1363
        %s1369 = scalar_lea.vmem [#allocation8], 32
        %v1370 = vld [vmem:[%s1369] sm:$0xff]
        %v1372 = vcombine.high %v1370, %v1370
        %v1374 = vmul.f32 %v1368, %v1370
        %v1375 = vmul.f32 %v1367, %v1372
        %v1378 = vcombine.low %v1374, %v1375
        %v1380 = vadd.f32 %v1361, %v1378
        %1381 = vrot.lane.b32.xlu0 %v1282, 54
        %v1382 = vpop.permute.xlu0 %1381
        %1383 = vrot.lane.b32.xlu0 %v1286, 54
        %v1384 = vpop.permute.xlu0 %1383
        %vm1385 = vcmp.lt.s32.totalorder %v462, 54
        %v1386 = vsel %vm1385, %v1382, %v1384
        %v1387 = vsel %vm1385, %v1384, %v1382
        %s1388 = scalar_lea.vmem [#allocation8], 40
        %v1389 = vld [vmem:[%s1388] sm:$0xff]
        %v1391 = vcombine.high %v1389, %v1389
        %v1393 = vmul.f32 %v1387, %v1389
        %v1394 = vmul.f32 %v1386, %v1391
        %v1397 = vcombine.low %v1393, %v1394
        %v1399 = vadd.f32 %v1380, %v1397
        %1400 = vrot.lane.b32.xlu0 %v1282, 51
        %v1401 = vpop.permute.xlu0 %1400
        %1402 = vrot.lane.b32.xlu0 %v1286, 51
        %v1403 = vpop.permute.xlu0 %1402
        %vm1404 = vcmp.lt.s32.totalorder %v462, 51
        %v1405 = vsel %vm1404, %v1401, %v1403
        %v1406 = vsel %vm1404, %v1403, %v1401
        %s1407 = scalar_lea.vmem [#allocation8], 48
        %v1408 = vld [vmem:[%s1407] sm:$0xff]
        %v1410 = vcombine.high %v1408, %v1408
        %v1412 = vmul.f32 %v1406, %v1408
        %v1413 = vmul.f32 %v1405, %v1410
        %v1416 = vcombine.low %v1412, %v1413
        %v1418 = vadd.f32 %v1399, %v1416
        %1419 = vrot.lane.b32.xlu0 %v1282, 48
        %v1420 = vpop.permute.xlu0 %1419
        %1421 = vrot.lane.b32.xlu0 %v1286, 48
        %v1422 = vpop.permute.xlu0 %1421
        %vm1423 = vcmp.lt.s32.totalorder %v462, 48
        %v1424 = vsel %vm1423, %v1420, %v1422
        %v1425 = vsel %vm1423, %v1422, %v1420
        %s1426 = scalar_lea.vmem [#allocation8], 56
        %v1427 = vld [vmem:[%s1426] sm:$0xff]
        %v1429 = vcombine.high %v1427, %v1427
        %v1431 = vmul.f32 %v1425, %v1427
        %v1432 = vmul.f32 %v1424, %v1429
        %v1435 = vcombine.low %v1431, %v1432
        %v1437 = vadd.f32 %v1418, %v1435
        %1438 = vrot.lane.b32.xlu0 %v1282, 45
        %v1439 = vpop.permute.xlu0 %1438
        %1440 = vrot.lane.b32.xlu0 %v1286, 45
        %v1441 = vpop.permute.xlu0 %1440
        %vm1442 = vcmp.lt.s32.totalorder %v462, 45
        %v1443 = vsel %vm1442, %v1439, %v1441
        %v1444 = vsel %vm1442, %v1441, %v1439
        %s1445 = scalar_lea.vmem [#allocation8], 64
        %v1446 = vld [vmem:[%s1445] sm:$0xff]
        %v1448 = vcombine.high %v1446, %v1446
        %v1450 = vmul.f32 %v1444, %v1446
        %v1451 = vmul.f32 %v1443, %v1448
        %v1454 = vcombine.low %v1450, %v1451
        %v1456 = vadd.f32 %v1437, %v1454
        %1457 = vrot.lane.b32.xlu0 %v1282, 42
        %v1458 = vpop.permute.xlu0 %1457
        %1459 = vrot.lane.b32.xlu0 %v1286, 42
        %v1460 = vpop.permute.xlu0 %1459
        %vm1461 = vcmp.lt.s32.totalorder %v462, 42
        %v1462 = vsel %vm1461, %v1458, %v1460
        %v1463 = vsel %vm1461, %v1460, %v1458
        %s1464 = scalar_lea.vmem [#allocation8], 72
        %v1465 = vld [vmem:[%s1464] sm:$0xff]
        %v1467 = vcombine.high %v1465, %v1465
        %v1469 = vmul.f32 %v1463, %v1465
        %v1470 = vmul.f32 %v1462, %v1467
        %v1473 = vcombine.low %v1469, %v1470
        %v1475 = vadd.f32 %v1456, %v1473
        %1476 = vrot.lane.b32.xlu0 %v1282, 6
        %v1477 = vpop.permute.xlu0 %1476
        %1478 = vrot.lane.b32.xlu0 %v1286, 6
        %v1479 = vpop.permute.xlu0 %1478
        %vm1480 = vcmp.lt.s32.totalorder %v462, 6
        %v1481 = vsel %vm1480, %v1477, %v1479
        %v1482 = vsel %vm1480, %v1479, %v1477
        %s1483 = scalar_lea.vmem [#allocation8], 80
        %v1484 = vld [vmem:[%s1483] sm:$0xff]
        %v1486 = vcombine.high %v1484, %v1484
        %v1488 = vmul.f32 %v1482, %v1484
        %v1489 = vmul.f32 %v1481, %v1486
        %v1492 = vcombine.low %v1488, %v1489
        %v1494 = vadd.f32 %v1475, %v1492
        %1495 = vrot.lane.b32.xlu0 %v1282, 3
        %v1496 = vpop.permute.xlu0 %1495
        %1497 = vrot.lane.b32.xlu0 %v1286, 3
        %v1498 = vpop.permute.xlu0 %1497
        %vm1499 = vcmp.lt.s32.totalorder %v462, 3
        %v1500 = vsel %vm1499, %v1496, %v1498
        %v1501 = vsel %vm1499, %v1498, %v1496
        %s1502 = scalar_lea.vmem [#allocation8], 88
        %v1503 = vld [vmem:[%s1502] sm:$0xff]
        %v1505 = vcombine.high %v1503, %v1503
        %v1507 = vmul.f32 %v1501, %v1503
        %v1508 = vmul.f32 %v1500, %v1505
        %v1511 = vcombine.low %v1507, %v1508
        %v1513 = vadd.f32 %v1494, %v1511
        %s1514 = scalar_lea.vmem [#allocation8], 96
        %v1515 = vld [vmem:[%s1514] sm:$0xff]
        %v1516 = vmul.f32 %v1282, %v1515
        %v1517 = vadd.f32 %v1513, %v1516
        %1518 = vrot.lane.b32.xlu0 %v1282, 125
        %v1519 = vpop.permute.xlu0 %1518
        %1520 = vrot.lane.b32.xlu0 %v1286, 125
        %v1521 = vpop.permute.xlu0 %1520
        %vm1522 = vcmp.lt.s32.totalorder %v462, 125
        %v1523 = vsel %vm1522, %v1519, %v1521
        %v1524 = vsel %vm1522, %v1521, %v1519
        %s1525 = scalar_lea.vmem [#allocation8], 104
        %v1526 = vld [vmem:[%s1525] sm:$0xff]
        %v1528 = vcombine.high %v1526, %v1526
        %v1530 = vmul.f32 %v1523, %v1526
        %v1531 = vmul.f32 %v1524, %v1528
        %v1534 = vcombine.low %v1530, %v1531
        %v1536 = vadd.f32 %v1517, %v1534
        %1537 = vrot.lane.b32.xlu0 %v1282, 122
        %v1538 = vpop.permute.xlu0 %1537
        %1539 = vrot.lane.b32.xlu0 %v1286, 122
        %v1540 = vpop.permute.xlu0 %1539
        %vm1541 = vcmp.lt.s32.totalorder %v462, 122
        %v1542 = vsel %vm1541, %v1538, %v1540
        %v1543 = vsel %vm1541, %v1540, %v1538
        %s1544 = scalar_lea.vmem [#allocation8], 112
        %v1545 = vld [vmem:[%s1544] sm:$0xff]
        %v1547 = vcombine.high %v1545, %v1545
        %v1549 = vmul.f32 %v1542, %v1545
        %v1550 = vmul.f32 %v1543, %v1547
        %v1553 = vcombine.low %v1549, %v1550
        %v1555 = vadd.f32 %v1536, %v1553
        %1556 = vrot.lane.b32.xlu0 %v1282, 86
        %v1557 = vpop.permute.xlu0 %1556
        %1558 = vrot.lane.b32.xlu0 %v1286, 86
        %v1559 = vpop.permute.xlu0 %1558
        %vm1560 = vcmp.lt.s32.totalorder %v462, 86
        %v1561 = vsel %vm1560, %v1557, %v1559
        %v1562 = vsel %vm1560, %v1559, %v1557
        %s1563 = scalar_lea.vmem [#allocation8], 120
        %v1564 = vld [vmem:[%s1563] sm:$0xff]
        %v1566 = vcombine.high %v1564, %v1564
        %v1568 = vmul.f32 %v1561, %v1564
        %v1569 = vmul.f32 %v1562, %v1566
        %v1572 = vcombine.low %v1568, %v1569
        %v1574 = vadd.f32 %v1555, %v1572
        %1575 = vrot.lane.b32.xlu0 %v1282, 83
        %v1576 = vpop.permute.xlu0 %1575
        %1577 = vrot.lane.b32.xlu0 %v1286, 83
        %v1578 = vpop.permute.xlu0 %1577
        %vm1579 = vcmp.lt.s32.totalorder %v462, 83
        %v1580 = vsel %vm1579, %v1576, %v1578
        %v1581 = vsel %vm1579, %v1578, %v1576
        %s1582 = scalar_lea.vmem [#allocation8], 128
        %v1583 = vld [vmem:[%s1582] sm:$0xff]
        %v1585 = vcombine.high %v1583, %v1583
        %v1587 = vmul.f32 %v1580, %v1583
        %v1588 = vmul.f32 %v1581, %v1585
        %v1591 = vcombine.low %v1587, %v1588
        %v1593 = vadd.f32 %v1574, %v1591
        %1594 = vrot.lane.b32.xlu0 %v1282, 80
        %v1595 = vpop.permute.xlu0 %1594
        %1596 = vrot.lane.b32.xlu0 %v1286, 80
        %v1597 = vpop.permute.xlu0 %1596
        %vm1598 = vcmp.lt.s32.totalorder %v462, 80
        %v1599 = vsel %vm1598, %v1595, %v1597
        %v1600 = vsel %vm1598, %v1597, %v1595
        %s1601 = scalar_lea.vmem [#allocation8], 136
        %v1602 = vld [vmem:[%s1601] sm:$0xff]
        %v1604 = vcombine.high %v1602, %v1602
        %v1606 = vmul.f32 %v1599, %v1602
        %v1607 = vmul.f32 %v1600, %v1604
        %v1610 = vcombine.low %v1606, %v1607
        %v1612 = vadd.f32 %v1593, %v1610
        %1613 = vrot.lane.b32.xlu0 %v1282, 77
        %v1614 = vpop.permute.xlu0 %1613
        %1615 = vrot.lane.b32.xlu0 %v1286, 77
        %v1616 = vpop.permute.xlu0 %1615
        %vm1617 = vcmp.lt.s32.totalorder %v462, 77
        %v1618 = vsel %vm1617, %v1614, %v1616
        %v1619 = vsel %vm1617, %v1616, %v1614
        %s1620 = scalar_lea.vmem [#allocation8], 144
        %v1621 = vld [vmem:[%s1620] sm:$0xff]
        %v1623 = vcombine.high %v1621, %v1621
        %v1625 = vmul.f32 %v1618, %v1621
        %v1626 = vmul.f32 %v1619, %v1623
        %v1629 = vcombine.low %v1625, %v1626
        %v1631 = vadd.f32 %v1612, %v1629
        %1632 = vrot.lane.b32.xlu0 %v1282, 74
        %v1633 = vpop.permute.xlu0 %1632
        %1634 = vrot.lane.b32.xlu0 %v1286, 74
        %v1635 = vpop.permute.xlu0 %1634
        %vm1636 = vcmp.lt.s32.totalorder %v462, 74
        %v1637 = vsel %vm1636, %v1633, %v1635
        %v1638 = vsel %vm1636, %v1635, %v1633
        %s1639 = scalar_lea.vmem [#allocation8], 152
        %v1640 = vld [vmem:[%s1639] sm:$0xff]
        %v1642 = vcombine.high %v1640, %v1640
        %v1644 = vmul.f32 %v1637, %v1640
        %v1645 = vmul.f32 %v1638, %v1642
        %v1648 = vcombine.low %v1644, %v1645
        %v1650 = vadd.f32 %v1631, %v1648
        %1651 = vrot.lane.b32.xlu0 %v1282, 38
        %v1652 = vpop.permute.xlu0 %1651
        %1653 = vrot.lane.b32.xlu0 %v1286, 38
        %v1654 = vpop.permute.xlu0 %1653
        %vm1655 = vcmp.lt.s32.totalorder %v462, 38
        %v1656 = vsel %vm1655, %v1652, %v1654
        %v1657 = vsel %vm1655, %v1654, %v1652
        %s1658 = scalar_lea.vmem [#allocation8], 160
        %v1659 = vld [vmem:[%s1658] sm:$0xff]
        %v1661 = vcombine.high %v1659, %v1659
        %v1663 = vmul.f32 %v1656, %v1659
        %v1664 = vmul.f32 %v1657, %v1661
        %v1667 = vcombine.low %v1663, %v1664
        %v1669 = vadd.f32 %v1650, %v1667
        %1670 = vrot.lane.b32.xlu0 %v1282, 35
        %v1671 = vpop.permute.xlu0 %1670
        %1672 = vrot.lane.b32.xlu0 %v1286, 35
        %v1673 = vpop.permute.xlu0 %1672
        %vm1674 = vcmp.lt.s32.totalorder %v462, 35
        %v1675 = vsel %vm1674, %v1671, %v1673
        %v1676 = vsel %vm1674, %v1673, %v1671
        %s1677 = scalar_lea.vmem [#allocation8], 168
        %v1678 = vld [vmem:[%s1677] sm:$0xff]
        %v1680 = vcombine.high %v1678, %v1678
        %v1682 = vmul.f32 %v1675, %v1678
        %v1683 = vmul.f32 %v1676, %v1680
        %v1686 = vcombine.low %v1682, %v1683
        %v1688 = vadd.f32 %v1669, %v1686
        %1689 = vrot.lane.b32.xlu0 %v1282, 32
        %v1690 = vpop.permute.xlu0 %1689
        %1691 = vrot.lane.b32.xlu0 %v1286, 32
        %v1692 = vpop.permute.xlu0 %1691
        %v1693 = vsel %vm865, %v1690, %v1692
        %v1694 = vsel %vm865, %v1692, %v1690
        %s1695 = scalar_lea.vmem [#allocation8], 176
        %v1696 = vld [vmem:[%s1695] sm:$0xff]
        %v1698 = vcombine.high %v1696, %v1696
        %v1700 = vmul.f32 %v1693, %v1696
        %v1701 = vmul.f32 %v1694, %v1698
        %v1704 = vcombine.low %v1700, %v1701
        %v1706 = vadd.f32 %v1688, %v1704
        %1707 = vrot.lane.b32.xlu0 %v1282, 29
        %v1708 = vpop.permute.xlu0 %1707
        %1709 = vrot.lane.b32.xlu0 %v1286, 29
        %v1710 = vpop.permute.xlu0 %1709
        %vm1711 = vcmp.lt.s32.totalorder %v462, 29
        %v1712 = vsel %vm1711, %v1708, %v1710
        %v1713 = vsel %vm1711, %v1710, %v1708
        %s1714 = scalar_lea.vmem [#allocation8], 184
        %v1715 = vld [vmem:[%s1714] sm:$0xff]
        %v1717 = vcombine.high %v1715, %v1715
        %v1719 = vmul.f32 %v1712, %v1715
        %v1720 = vmul.f32 %v1713, %v1717
        %v1723 = vcombine.low %v1719, %v1720
        %v1725 = vadd.f32 %v1706, %v1723
        %1726 = vrot.lane.b32.xlu0 %v1282, 26
        %v1727 = vpop.permute.xlu0 %1726
        %1728 = vrot.lane.b32.xlu0 %v1286, 26
        %v1729 = vpop.permute.xlu0 %1728
        %vm1730 = vcmp.lt.s32.totalorder %v462, 26
        %v1731 = vsel %vm1730, %v1727, %v1729
        %v1732 = vsel %vm1730, %v1729, %v1727
        %s1733 = scalar_lea.vmem [#allocation8], 192
        %v1734 = vld [vmem:[%s1733] sm:$0xff]
        %v1736 = vcombine.high %v1734, %v1734
        %v1738 = vmul.f32 %v1731, %v1734
        %v1739 = vmul.f32 %v1732, %v1736
        %v1742 = vcombine.low %v1738, %v1739
        %v1744 = vadd.f32 %v1725, %v1742
        %v1746 = vcombine.high %v1744, %v1744
        %v1748 = vmul.f32 %v814, %v1744
        %v1749 = vmul.f32 %v815, %v1746
        %v1750 = vcombine.high %v299, %v299
        %v1752 = vadd.f32 %v1748, %v299
        %v1753 = vadd.f32 %v1749, %v1750
        %v1756 = vcombine.low %v1752, %v1753
        %1758 = vst [vmem:[%s298] sm:$0xff] %v1756
        %s1759 = sand.u32 %s142, 1
        %s1760 = scalar_lea.sflag [#allocation4], %s1759
        %s1761 = sand.u32 %s142, 1
        %s1762 = smul.addr %s1761, 8
        %s1763 = scalar_lea.vmem [#allocation11], %s1762
        // Predicated region
        $region61: #{tpu_custom_call.1} parent=39 // pred_check
          %p1764 = pneg %p152
        $region62: #{tpu_custom_call.1} parent=39 // pred_check_branch
          %1766 = sbr.rel (%p1764) target = $region64
        $region63: #{tpu_custom_call.1} parent=39 // pred_region
          %s1768 = ssub.s32 128, 128
          %1769 = vsyncadd %s1760, %s1768
          %s1770 = smul.addr %s24, 2
          %s1771 = smul.addr %s1770, 64
          %s1772 = scalar_lea.hbm %s5, %s1771
          %s1774 = sshll.u32 %s1763, 4
          %s1775 = int_to_ptr.vmem [resolvable:$true] %s1774
          %1777 = dma.vmem_to_hbm [thread:$0]  %s1775, 128, %s1772, %s1760
        $region64: #{tpu_custom_call.1} parent=39 // pred_fallthru
          _
      $region40: #{tpu_custom_call.1} parent=5 // pred_fallthru
        _
      %p1778 = scmp.le.s32.totalorder 2, %s19
      // Predicated region
      $region65: #{tpu_custom_call.1} parent=5 // pred_check
        %p1779 = pneg %p1778
      $region66: #{tpu_custom_call.1} parent=5 // pred_check_branch
        %1781 = sbr.rel (%p1779) target = $region68
      $region67: #{tpu_custom_call.1} parent=5 // pred_region
        %s1782 = ssub.s32 %s19, 2
        // Predicated region
        $region69: #{tpu_custom_call.1} parent=67 // pred_check
          %p1783 = pneg %p158
        $region70: #{tpu_custom_call.1} parent=67 // pred_check_branch
          %1785 = sbr.rel (%p1783) target = $region72
        $region71: #{tpu_custom_call.1} parent=67 // pred_region
          %s1786 = sand.u32 %s143, 1
          %s1787 = scalar_lea.sflag [#allocation4], %s1786
          %s1788 = sand.u32 %s143, 1
          %s1789 = smul.addr %s1788, 8
          %s1790 = scalar_lea.vmem [#allocation11], %s1789
          %1791 = dma.done %s1787, 128
        $region72: #{tpu_custom_call.1} parent=67 // pred_fallthru
          _
      $region68: #{tpu_custom_call.1} parent=5 // pred_fallthru
        _
    $region6: #{tpu_custom_call.1} parent=1 // loop_footer
      %s23 = sadd.s32 1, %s19
    $region7: #{tpu_custom_call.1} parent=1 // loop_footer_branch
      %18 = sbr.rel target = $region3
    $region8: #{tpu_custom_call.1} parent=1 // loop_exit
      _
    %1792 = vsyncpa [#allocation3], 1
    %s1793 = scalar_lea.sflag [#allocation3], 1
    %1794 = vsyncpa %s1793, 1
    %1795 = vsyncpa [#allocation6], 1
    %1796 = vsyncpa [#allocation9], 1
    %1797 = vsyncpa [#allocation4], 1
    %s1798 = scalar_lea.sflag [#allocation4], 1
    %1799 = vsyncpa %s1798, 1

</llo_original>
